<compile_context>
chip_gen: v5e
topology: v5e:2x2
jax: 0.10.0
libtpu: 0.0.40
codegen_flags: <defaults>
</compile_context>

<pallas_src>
import jax
import jax.numpy as jnp
from jax.experimental import pallas as pl
from jax.experimental.pallas import tpu as pltpu

WINDOW_SIZE = 35


def rnn_encoder_kernel(x_ref, wx_ref, wh_ref, b_ref, o_ref, xw_ref):
    """Whole recurrence in VMEM, single invocation (no grid).

    x_ref : (T*B, U) f32 -- inputs, time-major, flattened (row t*B+b = x[b, t])
    wx_ref: (U, U)   f32 -- input->hidden weight (pre-transposed)
    wh_ref: (U, U)   f32 -- hidden->hidden weight (pre-transposed)
    b_ref : (1, U)   f32 -- bias
    o_ref : (B, U)   f32 -- final hidden state (module's return value)
    xw_ref: (T*B, U) f32 -- VMEM scratch for the precomputed input projection
    """
    # One streaming MXU matmul for all timesteps; bias folded in here so no
    # per-step broadcast/add remains on the serial critical path.
    xw_ref[...] = (
        jnp.dot(x_ref[...], wx_ref[...], preferred_element_type=jnp.float32)
        + b_ref[...]
    )

    wh = wh_ref[...]
    B = o_ref.shape[0]
    h = jnp.zeros(o_ref.shape, jnp.float32)

    # Fixed short trip count -> fully unroll (static slice starts, lets the
    # scheduler overlap the xw load, MXU pop and the ReLU/add VALU work of
    # adjacent steps).
    for i in range(WINDOW_SIZE):
        xw_t = xw_ref[i * B:(i + 1) * B, :]                    # (B, U)
        h = jnp.maximum(
            xw_t + jnp.dot(h, wh, preferred_element_type=jnp.float32), 0.0)

    o_ref[...] = h


def rnn_encoder(x, weight, bias):
    """Forward pass of RNNEncoder.

    x      : (B, T, U) f32, T must be >= WINDOW_SIZE (only first 35 used).
    weight : (U, 2U)   f32  -- PyTorch nn.Linear weight layout.
    bias   : (U,)      f32
    returns: (B, U)    f32  -- hidden state after WINDOW_SIZE steps.
    """
    B, T, U = x.shape
    assert T >= WINDOW_SIZE
    assert weight.shape == (U, 2 * U)

    # cat([x_t, h]) @ W.T == x_t @ W[:, :U].T + h @ W[:, U:].T
    wx = jnp.transpose(weight[:, :U])                          # (U, U)
    wh = jnp.transpose(weight[:, U:])                          # (U, U)
    b2 = bias.reshape(1, U)                                    # (1, U)

    # Only the timesteps the recurrence actually uses; time-major and flat so
    # the in-kernel projection is one plain 2-D matmul.
    x_flat = jnp.transpose(x[:, :WINDOW_SIZE, :], (1, 0, 2)).reshape(
        WINDOW_SIZE * B, U)

    vmem = pl.BlockSpec(memory_space=pltpu.MemorySpace.VMEM)
    out = pl.pallas_call(
        rnn_encoder_kernel,
        out_shape=jax.ShapeDtypeStruct((B, U), jnp.float32),
        in_specs=[vmem, vmem, vmem, vmem],
        out_specs=vmem,
        scratch_shapes=[pltpu.VMEM((WINDOW_SIZE * B, U), jnp.float32)],
    )(x_flat, wx, wh, b2)
    return out


def rnn_encoder_ref(x, weight, bias):
    """Pure-JAX reference mirroring the PyTorch forward exactly."""
    B, T, U = x.shape
    h = jnp.zeros((B, U), jnp.float32)
    for i in range(WINDOW_SIZE):
        x_in = jnp.concatenate([x[:, i, :], h], axis=1)        # (B, 2U)
        out = x_in @ weight.T + bias
        h = jax.nn.relu(out)
    return h


if __name__ == "__main__":
    units = 32
    batch = 8
    time = WINDOW_SIZE  # forward loops over exactly WINDOW_SIZE timesteps

    key = jax.random.PRNGKey(0)
    k_x, k_w, k_b = jax.random.split(key, 3)

    x = jax.random.normal(k_x, (batch, time, units), dtype=jnp.float32)

    # Deterministic nn.Linear(units*2, units) init (uniform +/- 1/sqrt(fan_in)).
    fan_in = 2 * units
    bound = 1.0 / jnp.sqrt(jnp.float32(fan_in))
    weight = jax.random.uniform(
        k_w, (units, 2 * units), dtype=jnp.float32, minval=-bound, maxval=bound)
    bias = jax.random.uniform(
        k_b, (units,), dtype=jnp.float32, minval=-bound, maxval=bound)

    out = rnn_encoder(x, weight, bias)
    out = jax.block_until_ready(out)

    ref = rnn_encoder_ref(x, weight, bias)
    assert out.shape == (batch, units)
    assert jnp.allclose(out, ref, atol=1e-5, rtol=1e-5), "mismatch vs reference"

    print("KERNEL_OK")
</pallas_src>

<mosaic_0001>
module attributes {stable_mosaic.version = 11 : i64} {
  func.func @rnn_encoder_kernel(%arg0: memref<280x32xf32, #tpu.memory_space<vmem>>, %arg1: memref<32x32xf32, #tpu.memory_space<vmem>>, %arg2: memref<32x32xf32, #tpu.memory_space<vmem>>, %arg3: memref<1x32xf32, #tpu.memory_space<vmem>>, %arg4: memref<8x32xf32, #tpu.memory_space<vmem>>, %arg5: memref<280x32xf32, #tpu.memory_space<vmem>>) attributes {dimension_semantics = [], scalar_prefetch = 0 : i64, scratch_operands = 1 : i64, tpu.core_type = #tpu.core_type<tc>} {
    %c0 = arith.constant 0 : index
    %c0_0 = arith.constant 0 : index
    %0 = vector.load %arg0[%c0, %c0_0] : memref<280x32xf32, #tpu.memory_space<vmem>>, vector<280x32xf32>
    %c0_1 = arith.constant 0 : index
    %c0_2 = arith.constant 0 : index
    %1 = vector.load %arg1[%c0_1, %c0_2] : memref<32x32xf32, #tpu.memory_space<vmem>>, vector<32x32xf32>
    %cst = arith.constant dense<0.000000e+00> : vector<280x32xf32>
    %2 = tpu.matmul %0, %1, %cst {dimension_numbers = #tpu.dot_dimension_numbers<[1], [0], [0], [1], [0, 0, 1, 1], [], []>} : vector<280x32xf32>, vector<32x32xf32>, vector<280x32xf32> -> vector<280x32xf32>
    %c0_3 = arith.constant 0 : index
    %c0_4 = arith.constant 0 : index
    %3 = vector.load %arg3[%c0_3, %c0_4] : memref<1x32xf32, #tpu.memory_space<vmem>>, vector<1x32xf32>
    %4 = vector.broadcast %3 : vector<1x32xf32> to vector<280x32xf32>
    %5 = arith.addf %2, %4 : vector<280x32xf32>
    %c0_5 = arith.constant 0 : index
    %c0_6 = arith.constant 0 : index
    %6 = vector.load %arg5[%c0_5, %c0_6] : memref<280x32xf32, #tpu.memory_space<vmem>>, vector<280x32xf32>
    tpu.vector_store %arg5[%c0_5, %c0_6], %5 {strides = array<i32>} : memref<280x32xf32, #tpu.memory_space<vmem>>, vector<280x32xf32>,
    %c0_7 = arith.constant 0 : index
    %c0_8 = arith.constant 0 : index
    %7 = vector.load %arg2[%c0_7, %c0_8] : memref<32x32xf32, #tpu.memory_space<vmem>>, vector<32x32xf32>
    %cst_9 = arith.constant 0.000000e+00 : f32
    %8 = vector.broadcast %cst_9 : f32 to vector<8x32xf32>
    %c0_10 = arith.constant 0 : index
    %c0_11 = arith.constant 0 : index
    %9 = vector.load %arg5[%c0_10, %c0_11] : memref<280x32xf32, #tpu.memory_space<vmem>>, vector<8x32xf32>
    %cst_12 = arith.constant dense<0.000000e+00> : vector<8x32xf32>
    %10 = tpu.matmul %8, %7, %cst_12 {dimension_numbers = #tpu.dot_dimension_numbers<[1], [0], [0], [1], [0, 0, 1, 1], [], []>} : vector<8x32xf32>, vector<32x32xf32>, vector<8x32xf32> -> vector<8x32xf32>
    %11 = arith.addf %9, %10 : vector<8x32xf32>
    %cst_13 = arith.constant 0.000000e+00 : f32
    %12 = vector.broadcast %cst_13 : f32 to vector<8x32xf32>
    %13 = arith.maximumf %11, %12 : vector<8x32xf32>
    %c8 = arith.constant 8 : index
    %c0_14 = arith.constant 0 : index
    %14 = vector.load %arg5[%c8, %c0_14] : memref<280x32xf32, #tpu.memory_space<vmem>>, vector<8x32xf32>
    %cst_15 = arith.constant dense<0.000000e+00> : vector<8x32xf32>
    %15 = tpu.matmul %13, %7, %cst_15 {dimension_numbers = #tpu.dot_dimension_numbers<[1], [0], [0], [1], [0, 0, 1, 1], [], []>} : vector<8x32xf32>, vector<32x32xf32>, vector<8x32xf32> -> vector<8x32xf32>
    %16 = arith.addf %14, %15 : vector<8x32xf32>
    %cst_16 = arith.constant 0.000000e+00 : f32
    %17 = vector.broadcast %cst_16 : f32 to vector<8x32xf32>
    %18 = arith.maximumf %16, %17 : vector<8x32xf32>
    %c16 = arith.constant 16 : index
    %c0_17 = arith.constant 0 : index
    %19 = vector.load %arg5[%c16, %c0_17] : memref<280x32xf32, #tpu.memory_space<vmem>>, vector<8x32xf32>
    %cst_18 = arith.constant dense<0.000000e+00> : vector<8x32xf32>
    %20 = tpu.matmul %18, %7, %cst_18 {dimension_numbers = #tpu.dot_dimension_numbers<[1], [0], [0], [1], [0, 0, 1, 1], [], []>} : vector<8x32xf32>, vector<32x32xf32>, vector<8x32xf32> -> vector<8x32xf32>
    %21 = arith.addf %19, %20 : vector<8x32xf32>
    %cst_19 = arith.constant 0.000000e+00 : f32
    %22 = vector.broadcast %cst_19 : f32 to vector<8x32xf32>
    %23 = arith.maximumf %21, %22 : vector<8x32xf32>
    %c24 = arith.constant 24 : index
    %c0_20 = arith.constant 0 : index
    %24 = vector.load %arg5[%c24, %c0_20] : memref<280x32xf32, #tpu.memory_space<vmem>>, vector<8x32xf32>
    %cst_21 = arith.constant dense<0.000000e+00> : vector<8x32xf32>
    %25 = tpu.matmul %23, %7, %cst_21 {dimension_numbers = #tpu.dot_dimension_numbers<[1], [0], [0], [1], [0, 0, 1, 1], [], []>} : vector<8x32xf32>, vector<32x32xf32>, vector<8x32xf32> -> vector<8x32xf32>
    %26 = arith.addf %24, %25 : vector<8x32xf32>
    %cst_22 = arith.constant 0.000000e+00 : f32
    %27 = vector.broadcast %cst_22 : f32 to vector<8x32xf32>
    %28 = arith.maximumf %26, %27 : vector<8x32xf32>
    %c32 = arith.constant 32 : index
    %c0_23 = arith.constant 0 : index
    %29 = vector.load %arg5[%c32, %c0_23] : memref<280x32xf32, #tpu.memory_space<vmem>>, vector<8x32xf32>
    %cst_24 = arith.constant dense<0.000000e+00> : vector<8x32xf32>
    %30 = tpu.matmul %28, %7, %cst_24 {dimension_numbers = #tpu.dot_dimension_numbers<[1], [0], [0], [1], [0, 0, 1, 1], [], []>} : vector<8x32xf32>, vector<32x32xf32>, vector<8x32xf32> -> vector<8x32xf32>
    %31 = arith.addf %29, %30 : vector<8x32xf32>
    %cst_25 = arith.constant 0.000000e+00 : f32
    %32 = vector.broadcast %cst_25 : f32 to vector<8x32xf32>
    %33 = arith.maximumf %31, %32 : vector<8x32xf32>
    %c40 = arith.constant 40 : index
    %c0_26 = arith.constant 0 : index
    %34 = vector.load %arg5[%c40, %c0_26] : memref<280x32xf32, #tpu.memory_space<vmem>>, vector<8x32xf32>
    %cst_27 = arith.constant dense<0.000000e+00> : vector<8x32xf32>
    %35 = tpu.matmul %33, %7, %cst_27 {dimension_numbers = #tpu.dot_dimension_numbers<[1], [0], [0], [1], [0, 0, 1, 1], [], []>} : vector<8x32xf32>, vector<32x32xf32>, vector<8x32xf32> -> vector<8x32xf32>
    %36 = arith.addf %34, %35 : vector<8x32xf32>
    %cst_28 = arith.constant 0.000000e+00 : f32
    %37 = vector.broadcast %cst_28 : f32 to vector<8x32xf32>
    %38 = arith.maximumf %36, %37 : vector<8x32xf32>
    %c48 = arith.constant 48 : index
    %c0_29 = arith.constant 0 : index
    %39 = vector.load %arg5[%c48, %c0_29] : memref<280x32xf32, #tpu.memory_space<vmem>>, vector<8x32xf32>
    %cst_30 = arith.constant dense<0.000000e+00> : vector<8x32xf32>
    %40 = tpu.matmul %38, %7, %cst_30 {dimension_numbers = #tpu.dot_dimension_numbers<[1], [0], [0], [1], [0, 0, 1, 1], [], []>} : vector<8x32xf32>, vector<32x32xf32>, vector<8x32xf32> -> vector<8x32xf32>
    %41 = arith.addf %39, %40 : vector<8x32xf32>
    %cst_31 = arith.constant 0.000000e+00 : f32
    %42 = vector.broadcast %cst_31 : f32 to vector<8x32xf32>
    %43 = arith.maximumf %41, %42 : vector<8x32xf32>
    %c56 = arith.constant 56 : index
    %c0_32 = arith.constant 0 : index
    %44 = vector.load %arg5[%c56, %c0_32] : memref<280x32xf32, #tpu.memory_space<vmem>>, vector<8x32xf32>
    %cst_33 = arith.constant dense<0.000000e+00> : vector<8x32xf32>
    %45 = tpu.matmul %43, %7, %cst_33 {dimension_numbers = #tpu.dot_dimension_numbers<[1], [0], [0], [1], [0, 0, 1, 1], [], []>} : vector<8x32xf32>, vector<32x32xf32>, vector<8x32xf32> -> vector<8x32xf32>
    %46 = arith.addf %44, %45 : vector<8x32xf32>
    %cst_34 = arith.constant 0.000000e+00 : f32
    %47 = vector.broadcast %cst_34 : f32 to vector<8x32xf32>
    %48 = arith.maximumf %46, %47 : vector<8x32xf32>
    %c64 = arith.constant 64 : index
    %c0_35 = arith.constant 0 : index
    %49 = vector.load %arg5[%c64, %c0_35] : memref<280x32xf32, #tpu.memory_space<vmem>>, vector<8x32xf32>
    %cst_36 = arith.constant dense<0.000000e+00> : vector<8x32xf32>
    %50 = tpu.matmul %48, %7, %cst_36 {dimension_numbers = #tpu.dot_dimension_numbers<[1], [0], [0], [1], [0, 0, 1, 1], [], []>} : vector<8x32xf32>, vector<32x32xf32>, vector<8x32xf32> -> vector<8x32xf32>
    %51 = arith.addf %49, %50 : vector<8x32xf32>
    %cst_37 = arith.constant 0.000000e+00 : f32
    %52 = vector.broadcast %cst_37 : f32 to vector<8x32xf32>
    %53 = arith.maximumf %51, %52 : vector<8x32xf32>
    %c72 = arith.constant 72 : index
    %c0_38 = arith.constant 0 : index
    %54 = vector.load %arg5[%c72, %c0_38] : memref<280x32xf32, #tpu.memory_space<vmem>>, vector<8x32xf32>
    %cst_39 = arith.constant dense<0.000000e+00> : vector<8x32xf32>
    %55 = tpu.matmul %53, %7, %cst_39 {dimension_numbers = #tpu.dot_dimension_numbers<[1], [0], [0], [1], [0, 0, 1, 1], [], []>} : vector<8x32xf32>, vector<32x32xf32>, vector<8x32xf32> -> vector<8x32xf32>
    %56 = arith.addf %54, %55 : vector<8x32xf32>
    %cst_40 = arith.constant 0.000000e+00 : f32
    %57 = vector.broadcast %cst_40 : f32 to vector<8x32xf32>
    %58 = arith.maximumf %56, %57 : vector<8x32xf32>
    %c80 = arith.constant 80 : index
    %c0_41 = arith.constant 0 : index
    %59 = vector.load %arg5[%c80, %c0_41] : memref<280x32xf32, #tpu.memory_space<vmem>>, vector<8x32xf32>
    %cst_42 = arith.constant dense<0.000000e+00> : vector<8x32xf32>
    %60 = tpu.matmul %58, %7, %cst_42 {dimension_numbers = #tpu.dot_dimension_numbers<[1], [0], [0], [1], [0, 0, 1, 1], [], []>} : vector<8x32xf32>, vector<32x32xf32>, vector<8x32xf32> -> vector<8x32xf32>
    %61 = arith.addf %59, %60 : vector<8x32xf32>
    %cst_43 = arith.constant 0.000000e+00 : f32
    %62 = vector.broadcast %cst_43 : f32 to vector<8x32xf32>
    %63 = arith.maximumf %61, %62 : vector<8x32xf32>
    %c88 = arith.constant 88 : index
    %c0_44 = arith.constant 0 : index
    %64 = vector.load %arg5[%c88, %c0_44] : memref<280x32xf32, #tpu.memory_space<vmem>>, vector<8x32xf32>
    %cst_45 = arith.constant dense<0.000000e+00> : vector<8x32xf32>
    %65 = tpu.matmul %63, %7, %cst_45 {dimension_numbers = #tpu.dot_dimension_numbers<[1], [0], [0], [1], [0, 0, 1, 1], [], []>} : vector<8x32xf32>, vector<32x32xf32>, vector<8x32xf32> -> vector<8x32xf32>
    %66 = arith.addf %64, %65 : vector<8x32xf32>
    %cst_46 = arith.constant 0.000000e+00 : f32
    %67 = vector.broadcast %cst_46 : f32 to vector<8x32xf32>
    %68 = arith.maximumf %66, %67 : vector<8x32xf32>
    %c96 = arith.constant 96 : index
    %c0_47 = arith.constant 0 : index
    %69 = vector.load %arg5[%c96, %c0_47] : memref<280x32xf32, #tpu.memory_space<vmem>>, vector<8x32xf32>
    %cst_48 = arith.constant dense<0.000000e+00> : vector<8x32xf32>
    %70 = tpu.matmul %68, %7, %cst_48 {dimension_numbers = #tpu.dot_dimension_numbers<[1], [0], [0], [1], [0, 0, 1, 1], [], []>} : vector<8x32xf32>, vector<32x32xf32>, vector<8x32xf32> -> vector<8x32xf32>
    %71 = arith.addf %69, %70 : vector<8x32xf32>
    %cst_49 = arith.constant 0.000000e+00 : f32
    %72 = vector.broadcast %cst_49 : f32 to vector<8x32xf32>
    %73 = arith.maximumf %71, %72 : vector<8x32xf32>
    %c104 = arith.constant 104 : index
    %c0_50 = arith.constant 0 : index
    %74 = vector.load %arg5[%c104, %c0_50] : memref<280x32xf32, #tpu.memory_space<vmem>>, vector<8x32xf32>
    %cst_51 = arith.constant dense<0.000000e+00> : vector<8x32xf32>
    %75 = tpu.matmul %73, %7, %cst_51 {dimension_numbers = #tpu.dot_dimension_numbers<[1], [0], [0], [1], [0, 0, 1, 1], [], []>} : vector<8x32xf32>, vector<32x32xf32>, vector<8x32xf32> -> vector<8x32xf32>
    %76 = arith.addf %74, %75 : vector<8x32xf32>
    %cst_52 = arith.constant 0.000000e+00 : f32
    %77 = vector.broadcast %cst_52 : f32 to vector<8x32xf32>
    %78 = arith.maximumf %76, %77 : vector<8x32xf32>
    %c112 = arith.constant 112 : index
    %c0_53 = arith.constant 0 : index
    %79 = vector.load %arg5[%c112, %c0_53] : memref<280x32xf32, #tpu.memory_space<vmem>>, vector<8x32xf32>
    %cst_54 = arith.constant dense<0.000000e+00> : vector<8x32xf32>
    %80 = tpu.matmul %78, %7, %cst_54 {dimension_numbers = #tpu.dot_dimension_numbers<[1], [0], [0], [1], [0, 0, 1, 1], [], []>} : vector<8x32xf32>, vector<32x32xf32>, vector<8x32xf32> -> vector<8x32xf32>
    %81 = arith.addf %79, %80 : vector<8x32xf32>
    %cst_55 = arith.constant 0.000000e+00 : f32
    %82 = vector.broadcast %cst_55 : f32 to vector<8x32xf32>
    %83 = arith.maximumf %81, %82 : vector<8x32xf32>
    %c120 = arith.constant 120 : index
    %c0_56 = arith.constant 0 : index
    %84 = vector.load %arg5[%c120, %c0_56] : memref<280x32xf32, #tpu.memory_space<vmem>>, vector<8x32xf32>
    %cst_57 = arith.constant dense<0.000000e+00> : vector<8x32xf32>
    %85 = tpu.matmul %83, %7, %cst_57 {dimension_numbers = #tpu.dot_dimension_numbers<[1], [0], [0], [1], [0, 0, 1, 1], [], []>} : vector<8x32xf32>, vector<32x32xf32>, vector<8x32xf32> -> vector<8x32xf32>
    %86 = arith.addf %84, %85 : vector<8x32xf32>
    %cst_58 = arith.constant 0.000000e+00 : f32
    %87 = vector.broadcast %cst_58 : f32 to vector<8x32xf32>
    %88 = arith.maximumf %86, %87 : vector<8x32xf32>
    %c128 = arith.constant 128 : index
    %c0_59 = arith.constant 0 : index
    %89 = vector.load %arg5[%c128, %c0_59] : memref<280x32xf32, #tpu.memory_space<vmem>>, vector<8x32xf32>
    %cst_60 = arith.constant dense<0.000000e+00> : vector<8x32xf32>
    %90 = tpu.matmul %88, %7, %cst_60 {dimension_numbers = #tpu.dot_dimension_numbers<[1], [0], [0], [1], [0, 0, 1, 1], [], []>} : vector<8x32xf32>, vector<32x32xf32>, vector<8x32xf32> -> vector<8x32xf32>
    %91 = arith.addf %89, %90 : vector<8x32xf32>
    %cst_61 = arith.constant 0.000000e+00 : f32
    %92 = vector.broadcast %cst_61 : f32 to vector<8x32xf32>
    %93 = arith.maximumf %91, %92 : vector<8x32xf32>
    %c136 = arith.constant 136 : index
    %c0_62 = arith.constant 0 : index
    %94 = vector.load %arg5[%c136, %c0_62] : memref<280x32xf32, #tpu.memory_space<vmem>>, vector<8x32xf32>
    %cst_63 = arith.constant dense<0.000000e+00> : vector<8x32xf32>
    %95 = tpu.matmul %93, %7, %cst_63 {dimension_numbers = #tpu.dot_dimension_numbers<[1], [0], [0], [1], [0, 0, 1, 1], [], []>} : vector<8x32xf32>, vector<32x32xf32>, vector<8x32xf32> -> vector<8x32xf32>
    %96 = arith.addf %94, %95 : vector<8x32xf32>
    %cst_64 = arith.constant 0.000000e+00 : f32
    %97 = vector.broadcast %cst_64 : f32 to vector<8x32xf32>
    %98 = arith.maximumf %96, %97 : vector<8x32xf32>
    %c144 = arith.constant 144 : index
    %c0_65 = arith.constant 0 : index
    %99 = vector.load %arg5[%c144, %c0_65] : memref<280x32xf32, #tpu.memory_space<vmem>>, vector<8x32xf32>
    %cst_66 = arith.constant dense<0.000000e+00> : vector<8x32xf32>
    %100 = tpu.matmul %98, %7, %cst_66 {dimension_numbers = #tpu.dot_dimension_numbers<[1], [0], [0], [1], [0, 0, 1, 1], [], []>} : vector<8x32xf32>, vector<32x32xf32>, vector<8x32xf32> -> vector<8x32xf32>
    %101 = arith.addf %99, %100 : vector<8x32xf32>
    %cst_67 = arith.constant 0.000000e+00 : f32
    %102 = vector.broadcast %cst_67 : f32 to vector<8x32xf32>
    %103 = arith.maximumf %101, %102 : vector<8x32xf32>
    %c152 = arith.constant 152 : index
    %c0_68 = arith.constant 0 : index
    %104 = vector.load %arg5[%c152, %c0_68] : memref<280x32xf32, #tpu.memory_space<vmem>>, vector<8x32xf32>
    %cst_69 = arith.constant dense<0.000000e+00> : vector<8x32xf32>
    %105 = tpu.matmul %103, %7, %cst_69 {dimension_numbers = #tpu.dot_dimension_numbers<[1], [0], [0], [1], [0, 0, 1, 1], [], []>} : vector<8x32xf32>, vector<32x32xf32>, vector<8x32xf32> -> vector<8x32xf32>
    %106 = arith.addf %104, %105 : vector<8x32xf32>
    %cst_70 = arith.constant 0.000000e+00 : f32
    %107 = vector.broadcast %cst_70 : f32 to vector<8x32xf32>
    %108 = arith.maximumf %106, %107 : vector<8x32xf32>
    %c160 = arith.constant 160 : index
    %c0_71 = arith.constant 0 : index
    %109 = vector.load %arg5[%c160, %c0_71] : memref<280x32xf32, #tpu.memory_space<vmem>>, vector<8x32xf32>
    %cst_72 = arith.constant dense<0.000000e+00> : vector<8x32xf32>
    %110 = tpu.matmul %108, %7, %cst_72 {dimension_numbers = #tpu.dot_dimension_numbers<[1], [0], [0], [1], [0, 0, 1, 1], [], []>} : vector<8x32xf32>, vector<32x32xf32>, vector<8x32xf32> -> vector<8x32xf32>
    %111 = arith.addf %109, %110 : vector<8x32xf32>
    %cst_73 = arith.constant 0.000000e+00 : f32
    %112 = vector.broadcast %cst_73 : f32 to vector<8x32xf32>
    %113 = arith.maximumf %111, %112 : vector<8x32xf32>
    %c168 = arith.constant 168 : index
    %c0_74 = arith.constant 0 : index
    %114 = vector.load %arg5[%c168, %c0_74] : memref<280x32xf32, #tpu.memory_space<vmem>>, vector<8x32xf32>
    %cst_75 = arith.constant dense<0.000000e+00> : vector<8x32xf32>
    %115 = tpu.matmul %113, %7, %cst_75 {dimension_numbers = #tpu.dot_dimension_numbers<[1], [0], [0], [1], [0, 0, 1, 1], [], []>} : vector<8x32xf32>, vector<32x32xf32>, vector<8x32xf32> -> vector<8x32xf32>
    %116 = arith.addf %114, %115 : vector<8x32xf32>
    %cst_76 = arith.constant 0.000000e+00 : f32
    %117 = vector.broadcast %cst_76 : f32 to vector<8x32xf32>
    %118 = arith.maximumf %116, %117 : vector<8x32xf32>
    %c176 = arith.constant 176 : index
    %c0_77 = arith.constant 0 : index
    %119 = vector.load %arg5[%c176, %c0_77] : memref<280x32xf32, #tpu.memory_space<vmem>>, vector<8x32xf32>
    %cst_78 = arith.constant dense<0.000000e+00> : vector<8x32xf32>
    %120 = tpu.matmul %118, %7, %cst_78 {dimension_numbers = #tpu.dot_dimension_numbers<[1], [0], [0], [1], [0, 0, 1, 1], [], []>} : vector<8x32xf32>, vector<32x32xf32>, vector<8x32xf32> -> vector<8x32xf32>
    %121 = arith.addf %119, %120 : vector<8x32xf32>
    %cst_79 = arith.constant 0.000000e+00 : f32
    %122 = vector.broadcast %cst_79 : f32 to vector<8x32xf32>
    %123 = arith.maximumf %121, %122 : vector<8x32xf32>
    %c184 = arith.constant 184 : index
    %c0_80 = arith.constant 0 : index
    %124 = vector.load %arg5[%c184, %c0_80] : memref<280x32xf32, #tpu.memory_space<vmem>>, vector<8x32xf32>
    %cst_81 = arith.constant dense<0.000000e+00> : vector<8x32xf32>
    %125 = tpu.matmul %123, %7, %cst_81 {dimension_numbers = #tpu.dot_dimension_numbers<[1], [0], [0], [1], [0, 0, 1, 1], [], []>} : vector<8x32xf32>, vector<32x32xf32>, vector<8x32xf32> -> vector<8x32xf32>
    %126 = arith.addf %124, %125 : vector<8x32xf32>
    %cst_82 = arith.constant 0.000000e+00 : f32
    %127 = vector.broadcast %cst_82 : f32 to vector<8x32xf32>
    %128 = arith.maximumf %126, %127 : vector<8x32xf32>
    %c192 = arith.constant 192 : index
    %c0_83 = arith.constant 0 : index
    %129 = vector.load %arg5[%c192, %c0_83] : memref<280x32xf32, #tpu.memory_space<vmem>>, vector<8x32xf32>
    %cst_84 = arith.constant dense<0.000000e+00> : vector<8x32xf32>
    %130 = tpu.matmul %128, %7, %cst_84 {dimension_numbers = #tpu.dot_dimension_numbers<[1], [0], [0], [1], [0, 0, 1, 1], [], []>} : vector<8x32xf32>, vector<32x32xf32>, vector<8x32xf32> -> vector<8x32xf32>
    %131 = arith.addf %129, %130 : vector<8x32xf32>
    %cst_85 = arith.constant 0.000000e+00 : f32
    %132 = vector.broadcast %cst_85 : f32 to vector<8x32xf32>
    %133 = arith.maximumf %131, %132 : vector<8x32xf32>
    %c200 = arith.constant 200 : index
    %c0_86 = arith.constant 0 : index
    %134 = vector.load %arg5[%c200, %c0_86] : memref<280x32xf32, #tpu.memory_space<vmem>>, vector<8x32xf32>
    %cst_87 = arith.constant dense<0.000000e+00> : vector<8x32xf32>
    %135 = tpu.matmul %133, %7, %cst_87 {dimension_numbers = #tpu.dot_dimension_numbers<[1], [0], [0], [1], [0, 0, 1, 1], [], []>} : vector<8x32xf32>, vector<32x32xf32>, vector<8x32xf32> -> vector<8x32xf32>
    %136 = arith.addf %134, %135 : vector<8x32xf32>
    %cst_88 = arith.constant 0.000000e+00 : f32
    %137 = vector.broadcast %cst_88 : f32 to vector<8x32xf32>
    %138 = arith.maximumf %136, %137 : vector<8x32xf32>
    %c208 = arith.constant 208 : index
    %c0_89 = arith.constant 0 : index
    %139 = vector.load %arg5[%c208, %c0_89] : memref<280x32xf32, #tpu.memory_space<vmem>>, vector<8x32xf32>
    %cst_90 = arith.constant dense<0.000000e+00> : vector<8x32xf32>
    %140 = tpu.matmul %138, %7, %cst_90 {dimension_numbers = #tpu.dot_dimension_numbers<[1], [0], [0], [1], [0, 0, 1, 1], [], []>} : vector<8x32xf32>, vector<32x32xf32>, vector<8x32xf32> -> vector<8x32xf32>
    %141 = arith.addf %139, %140 : vector<8x32xf32>
    %cst_91 = arith.constant 0.000000e+00 : f32
    %142 = vector.broadcast %cst_91 : f32 to vector<8x32xf32>
    %143 = arith.maximumf %141, %142 : vector<8x32xf32>
    %c216 = arith.constant 216 : index
    %c0_92 = arith.constant 0 : index
    %144 = vector.load %arg5[%c216, %c0_92] : memref<280x32xf32, #tpu.memory_space<vmem>>, vector<8x32xf32>
    %cst_93 = arith.constant dense<0.000000e+00> : vector<8x32xf32>
    %145 = tpu.matmul %143, %7, %cst_93 {dimension_numbers = #tpu.dot_dimension_numbers<[1], [0], [0], [1], [0, 0, 1, 1], [], []>} : vector<8x32xf32>, vector<32x32xf32>, vector<8x32xf32> -> vector<8x32xf32>
    %146 = arith.addf %144, %145 : vector<8x32xf32>
    %cst_94 = arith.constant 0.000000e+00 : f32
    %147 = vector.broadcast %cst_94 : f32 to vector<8x32xf32>
    %148 = arith.maximumf %146, %147 : vector<8x32xf32>
    %c224 = arith.constant 224 : index
    %c0_95 = arith.constant 0 : index
    %149 = vector.load %arg5[%c224, %c0_95] : memref<280x32xf32, #tpu.memory_space<vmem>>, vector<8x32xf32>
    %cst_96 = arith.constant dense<0.000000e+00> : vector<8x32xf32>
    %150 = tpu.matmul %148, %7, %cst_96 {dimension_numbers = #tpu.dot_dimension_numbers<[1], [0], [0], [1], [0, 0, 1, 1], [], []>} : vector<8x32xf32>, vector<32x32xf32>, vector<8x32xf32> -> vector<8x32xf32>
    %151 = arith.addf %149, %150 : vector<8x32xf32>
    %cst_97 = arith.constant 0.000000e+00 : f32
    %152 = vector.broadcast %cst_97 : f32 to vector<8x32xf32>
    %153 = arith.maximumf %151, %152 : vector<8x32xf32>
    %c232 = arith.constant 232 : index
    %c0_98 = arith.constant 0 : index
    %154 = vector.load %arg5[%c232, %c0_98] : memref<280x32xf32, #tpu.memory_space<vmem>>, vector<8x32xf32>
    %cst_99 = arith.constant dense<0.000000e+00> : vector<8x32xf32>
    %155 = tpu.matmul %153, %7, %cst_99 {dimension_numbers = #tpu.dot_dimension_numbers<[1], [0], [0], [1], [0, 0, 1, 1], [], []>} : vector<8x32xf32>, vector<32x32xf32>, vector<8x32xf32> -> vector<8x32xf32>
    %156 = arith.addf %154, %155 : vector<8x32xf32>
    %cst_100 = arith.constant 0.000000e+00 : f32
    %157 = vector.broadcast %cst_100 : f32 to vector<8x32xf32>
    %158 = arith.maximumf %156, %157 : vector<8x32xf32>
    %c240 = arith.constant 240 : index
    %c0_101 = arith.constant 0 : index
    %159 = vector.load %arg5[%c240, %c0_101] : memref<280x32xf32, #tpu.memory_space<vmem>>, vector<8x32xf32>
    %cst_102 = arith.constant dense<0.000000e+00> : vector<8x32xf32>
    %160 = tpu.matmul %158, %7, %cst_102 {dimension_numbers = #tpu.dot_dimension_numbers<[1], [0], [0], [1], [0, 0, 1, 1], [], []>} : vector<8x32xf32>, vector<32x32xf32>, vector<8x32xf32> -> vector<8x32xf32>
    %161 = arith.addf %159, %160 : vector<8x32xf32>
    %cst_103 = arith.constant 0.000000e+00 : f32
    %162 = vector.broadcast %cst_103 : f32 to vector<8x32xf32>
    %163 = arith.maximumf %161, %162 : vector<8x32xf32>
    %c248 = arith.constant 248 : index
    %c0_104 = arith.constant 0 : index
    %164 = vector.load %arg5[%c248, %c0_104] : memref<280x32xf32, #tpu.memory_space<vmem>>, vector<8x32xf32>
    %cst_105 = arith.constant dense<0.000000e+00> : vector<8x32xf32>
    %165 = tpu.matmul %163, %7, %cst_105 {dimension_numbers = #tpu.dot_dimension_numbers<[1], [0], [0], [1], [0, 0, 1, 1], [], []>} : vector<8x32xf32>, vector<32x32xf32>, vector<8x32xf32> -> vector<8x32xf32>
    %166 = arith.addf %164, %165 : vector<8x32xf32>
    %cst_106 = arith.constant 0.000000e+00 : f32
    %167 = vector.broadcast %cst_106 : f32 to vector<8x32xf32>
    %168 = arith.maximumf %166, %167 : vector<8x32xf32>
    %c256 = arith.constant 256 : index
    %c0_107 = arith.constant 0 : index
    %169 = vector.load %arg5[%c256, %c0_107] : memref<280x32xf32, #tpu.memory_space<vmem>>, vector<8x32xf32>
    %cst_108 = arith.constant dense<0.000000e+00> : vector<8x32xf32>
    %170 = tpu.matmul %168, %7, %cst_108 {dimension_numbers = #tpu.dot_dimension_numbers<[1], [0], [0], [1], [0, 0, 1, 1], [], []>} : vector<8x32xf32>, vector<32x32xf32>, vector<8x32xf32> -> vector<8x32xf32>
    %171 = arith.addf %169, %170 : vector<8x32xf32>
    %cst_109 = arith.constant 0.000000e+00 : f32
    %172 = vector.broadcast %cst_109 : f32 to vector<8x32xf32>
    %173 = arith.maximumf %171, %172 : vector<8x32xf32>
    %c264 = arith.constant 264 : index
    %c0_110 = arith.constant 0 : index
    %174 = vector.load %arg5[%c264, %c0_110] : memref<280x32xf32, #tpu.memory_space<vmem>>, vector<8x32xf32>
    %cst_111 = arith.constant dense<0.000000e+00> : vector<8x32xf32>
    %175 = tpu.matmul %173, %7, %cst_111 {dimension_numbers = #tpu.dot_dimension_numbers<[1], [0], [0], [1], [0, 0, 1, 1], [], []>} : vector<8x32xf32>, vector<32x32xf32>, vector<8x32xf32> -> vector<8x32xf32>
    %176 = arith.addf %174, %175 : vector<8x32xf32>
    %cst_112 = arith.constant 0.000000e+00 : f32
    %177 = vector.broadcast %cst_112 : f32 to vector<8x32xf32>
    %178 = arith.maximumf %176, %177 : vector<8x32xf32>
    %c272 = arith.constant 272 : index
    %c0_113 = arith.constant 0 : index
    %179 = vector.load %arg5[%c272, %c0_113] : memref<280x32xf32, #tpu.memory_space<vmem>>, vector<8x32xf32>
    %cst_114 = arith.constant dense<0.000000e+00> : vector<8x32xf32>
    %180 = tpu.matmul %178, %7, %cst_114 {dimension_numbers = #tpu.dot_dimension_numbers<[1], [0], [0], [1], [0, 0, 1, 1], [], []>} : vector<8x32xf32>, vector<32x32xf32>, vector<8x32xf32> -> vector<8x32xf32>
    %181 = arith.addf %179, %180 : vector<8x32xf32>
    %cst_115 = arith.constant 0.000000e+00 : f32
    %182 = vector.broadcast %cst_115 : f32 to vector<8x32xf32>
    %183 = arith.maximumf %181, %182 : vector<8x32xf32>
    %c0_116 = arith.constant 0 : index
    %c0_117 = arith.constant 0 : index
    %184 = vector.load %arg4[%c0_116, %c0_117] : memref<8x32xf32, #tpu.memory_space<vmem>>, vector<8x32xf32>
    tpu.vector_store %arg4[%c0_116, %c0_117], %183 {strides = array<i32>} : memref<8x32xf32, #tpu.memory_space<vmem>>, vector<8x32xf32>,
    return
  }
}

</mosaic_0001>

<llo_original>
// kernel: tpu_custom_call.1
$region0: #{tpu_custom_call.1}
  #allocation0 [shape = 'u32[]', space=smem, size = 0x4, offset = 0x4, fixed_abs, tag = 'smem constant byte address 0x4 - core index']
  #allocation1 [shape = 'u32[72,128]{1,0:T(1,128)}', space=vmem, size = 0x9000, scoped, tag = 'internal scratch']
  #allocation2 [shape = 'f32[280,32]{1,0:T(8,128)}', space=vmem, size = 0x23000, scoped, tag = 'scratch operand']
  %s0 = inlined_call_operand.vmem [shape: f32[280,32], index: 0, kind: input, shape index: {}]
  %s1 = inlined_call_operand.vmem [shape: f32[32,32], index: 1, kind: input, shape index: {}]
  %s2 = inlined_call_operand.vmem [shape: f32[32,32], index: 2, kind: input, shape index: {}]
  %s3 = inlined_call_operand.vmem [shape: f32[1,32], index: 3, kind: input, shape index: {}]
  %s4 = inlined_call_operand.hbm [shape: f32[8,32], index: 4, kind: output, shape index: {}]
  %s5 = sld [smem:[#allocation0]]
  $region26: #{tpu_custom_call.1} parent=0
    _
  %s7 = ssub.s32 1, %s5
  %s8 = scalar_select 0, %s7, %s5
  $region1: #{tpu_custom_call.1} parent=0
    #allocation3 [shape = 'u8[4096]{0}', space=vmem, size = 0x1000, scoped, tag = 'output window, operand 0, single buffered']
    #allocation4 [shape = 's32[1]{0}', space=sflag, size = 0x4, scoped, tag = 'scoped memory for tpu_custom_call.1']
    %9 = vsyncpa [#allocation4], 0
    // Predicated region
    $region2: #{tpu_custom_call.1} parent=1 // pred_check
      _
    $region3: #{tpu_custom_call.1} parent=1 // pred_check_branch
      %11 = sbr.rel (0) target = $region5
    $region4: #{tpu_custom_call.1} parent=1 // pred_region
      _
    $region5: #{tpu_custom_call.1} parent=1 // pred_fallthru
      _
    // Predicated region
    $region6: #{tpu_custom_call.1} parent=1 // pred_check
      _
    $region7: #{tpu_custom_call.1} parent=1 // pred_check_branch
      %13 = sbr.rel (0) target = $region9
    $region8: #{tpu_custom_call.1} parent=1 // pred_region
      _
    $region9: #{tpu_custom_call.1} parent=1 // pred_fallthru
      _
    // Predicated region
    $region10: #{tpu_custom_call.1} parent=1 // pred_check
      _
    $region11: #{tpu_custom_call.1} parent=1 // pred_check_branch
      %15 = sbr.rel (0) target = $region13
    $region12: #{tpu_custom_call.1} parent=1 // pred_region
      _
    $region13: #{tpu_custom_call.1} parent=1 // pred_fallthru
      _
    // Predicated region
    $region14: #{tpu_custom_call.1} parent=1 // pred_check
      _
    $region15: #{tpu_custom_call.1} parent=1 // pred_check_branch
      %17 = sbr.rel (0) target = $region17
    $region16: #{tpu_custom_call.1} parent=1 // pred_region
      _
    $region17: #{tpu_custom_call.1} parent=1 // pred_fallthru
      _
    %v18 = vld [vmem:[%s0] sm:$0xff]
    %v19 = vld [vmem:[%s0 + $0x8] sm:$0xff]
    %v20 = vld [vmem:[%s0 + $0x10] sm:$0xff]
    %v21 = vld [vmem:[%s0 + $0x18] sm:$0xff]
    %v22 = vld [vmem:[%s0 + $0x20] sm:$0xff]
    %v23 = vld [vmem:[%s0 + $0x28] sm:$0xff]
    %v24 = vld [vmem:[%s0 + $0x30] sm:$0xff]
    %v25 = vld [vmem:[%s0 + $0x38] sm:$0xff]
    %v26 = vld [vmem:[%s0 + $0x40] sm:$0xff]
    %v27 = vld [vmem:[%s0 + $0x48] sm:$0xff]
    %v28 = vld [vmem:[%s0 + $0x50] sm:$0xff]
    %v29 = vld [vmem:[%s0 + $0x58] sm:$0xff]
    %v30 = vld [vmem:[%s0 + $0x60] sm:$0xff]
    %v31 = vld [vmem:[%s0 + $0x68] sm:$0xff]
    %v32 = vld [vmem:[%s0 + $0x70] sm:$0xff]
    %v33 = vld [vmem:[%s0 + $0x78] sm:$0xff]
    %v34 = vld [vmem:[%s0 + $0x80] sm:$0xff]
    %v35 = vld [vmem:[%s0 + $0x88] sm:$0xff]
    %v36 = vld [vmem:[%s0 + $0x90] sm:$0xff]
    %v37 = vld [vmem:[%s0 + $0x98] sm:$0xff]
    %v38 = vld [vmem:[%s0 + $0xa0] sm:$0xff]
    %v39 = vld [vmem:[%s0 + $0xa8] sm:$0xff]
    %v40 = vld [vmem:[%s0 + $0xb0] sm:$0xff]
    %v41 = vld [vmem:[%s0 + $0xb8] sm:$0xff]
    %v42 = vld [vmem:[%s0 + $0xc0] sm:$0xff]
    %v43 = vld [vmem:[%s0 + $0xc8] sm:$0xff]
    %v44 = vld [vmem:[%s0 + $0xd0] sm:$0xff]
    %v45 = vld [vmem:[%s0 + $0xd8] sm:$0xff]
    %v46 = vld [vmem:[%s0 + $0xe0] sm:$0xff]
    %v47 = vld [vmem:[%s0 + $0xe8] sm:$0xff]
    %v48 = vld [vmem:[%s0 + $0xf0] sm:$0xff]
    %v49 = vld [vmem:[%s0 + $0xf8] sm:$0xff]
    %v50 = vld [vmem:[%s0 + $0x100] sm:$0xff]
    %v51 = vld [vmem:[%s0 + $0x108] sm:$0xff]
    %v52 = vld [vmem:[%s0 + $0x110] sm:$0xff]
    %v53 = vld [vmem:[%s1] sm:$0xff]
    %v54 = vld [vmem:[%s1 + $0x8] sm:$0xff]
    %v55 = vld [vmem:[%s1 + $0x10] sm:$0xff]
    %v56 = vld [vmem:[%s1 + $0x18] sm:$0xff]
    %v57 = vld [vmem:[%s3] sm:$0x1]
    %v59 = vperm.slane %v57, 0
    %vm61 = vcmask 261120
    %v63 = vsel %vm61, %v18, 0
    %v66 = vsel %vm61, %v19, 0
    %v69 = vsel %vm61, %v20, 0
    %v72 = vsel %vm61, %v21, 0
    %v75 = vsel %vm61, %v22, 0
    %v78 = vsel %vm61, %v23, 0
    %v81 = vsel %vm61, %v24, 0
    %v84 = vsel %vm61, %v25, 0
    %v87 = vsel %vm61, %v26, 0
    %v90 = vsel %vm61, %v27, 0
    %v93 = vsel %vm61, %v28, 0
    %v96 = vsel %vm61, %v29, 0
    %v99 = vsel %vm61, %v30, 0
    %v102 = vsel %vm61, %v31, 0
    %v105 = vsel %vm61, %v32, 0
    %v108 = vsel %vm61, %v33, 0
    %v111 = vsel %vm61, %v34, 0
    %v114 = vsel %vm61, %v35, 0
    %v117 = vsel %vm61, %v36, 0
    %v120 = vsel %vm61, %v37, 0
    %v123 = vsel %vm61, %v38, 0
    %v126 = vsel %vm61, %v39, 0
    %v129 = vsel %vm61, %v40, 0
    %v132 = vsel %vm61, %v41, 0
    %v135 = vsel %vm61, %v42, 0
    %v138 = vsel %vm61, %v43, 0
    %v141 = vsel %vm61, %v44, 0
    %v144 = vsel %vm61, %v45, 0
    %v147 = vsel %vm61, %v46, 0
    %v150 = vsel %vm61, %v47, 0
    %v153 = vsel %vm61, %v48, 0
    %v156 = vsel %vm61, %v49, 0
    %v159 = vsel %vm61, %v50, 0
    %v162 = vsel %vm61, %v51, 0
    %v165 = vsel %vm61, %v52, 0
    %167 = vmatpush.msra.mxu0 0.0
    %168 = vmatpush.msra.mxu0 0.0
    %169 = vmatpush.msra.mxu0 0.0
    %170 = vmatpush.msra.mxu0 0.0
    %171 = vmatpush.msra.mxu0 0.0
    %172 = vmatpush.msra.mxu0 0.0
    %173 = vmatpush.msra.mxu0 0.0
    %174 = vmatpush.msra.mxu0 0.0
    %175 = vmatpush.msra.mxu0 0.0
    %176 = vmatpush.msra.mxu0 0.0
    %177 = vmatpush.msra.mxu0 0.0
    %178 = vmatpush.msra.mxu0 0.0
    %179 = vmatpush.msra.mxu0 %v56
    %180 = vmatpush.msra.mxu0 %v55
    %181 = vmatpush.msra.mxu0 %v54
    %182 = vmatpush.msra.mxu0 %v53
    %183 = vmatmul.f32.gmra.mxu0 %v63
    %v184 = vpop.f32.mrf.mxu0
    %v185 = vadd.f32 %v59, %v184
    %186 = vmatmul.f32.gmra.mxu0 %v66
    %v187 = vpop.f32.mrf.mxu0
    %v188 = vadd.f32 %v59, %v187
    %189 = vmatmul.f32.gmra.mxu0 %v69
    %v190 = vpop.f32.mrf.mxu0
    %v191 = vadd.f32 %v59, %v190
    %192 = vmatmul.f32.gmra.mxu0 %v72
    %v193 = vpop.f32.mrf.mxu0
    %v194 = vadd.f32 %v59, %v193
    %195 = vmatmul.f32.gmra.mxu0 %v75
    %v196 = vpop.f32.mrf.mxu0
    %v197 = vadd.f32 %v59, %v196
    %198 = vmatmul.f32.gmra.mxu0 %v78
    %v199 = vpop.f32.mrf.mxu0
    %v200 = vadd.f32 %v59, %v199
    %201 = vmatmul.f32.gmra.mxu0 %v81
    %v202 = vpop.f32.mrf.mxu0
    %v203 = vadd.f32 %v59, %v202
    %204 = vmatmul.f32.gmra.mxu0 %v84
    %v205 = vpop.f32.mrf.mxu0
    %v206 = vadd.f32 %v59, %v205
    %207 = vmatmul.f32.gmra.mxu0 %v87
    %v208 = vpop.f32.mrf.mxu0
    %v209 = vadd.f32 %v59, %v208
    %210 = vmatmul.f32.gmra.mxu0 %v90
    %v211 = vpop.f32.mrf.mxu0
    %v212 = vadd.f32 %v59, %v211
    %213 = vmatmul.f32.gmra.mxu0 %v93
    %v214 = vpop.f32.mrf.mxu0
    %v215 = vadd.f32 %v59, %v214
    %216 = vmatmul.f32.gmra.mxu0 %v96
    %v217 = vpop.f32.mrf.mxu0
    %v218 = vadd.f32 %v59, %v217
    %219 = vmatmul.f32.gmra.mxu0 %v99
    %v220 = vpop.f32.mrf.mxu0
    %v221 = vadd.f32 %v59, %v220
    %222 = vmatmul.f32.gmra.mxu0 %v102
    %v223 = vpop.f32.mrf.mxu0
    %v224 = vadd.f32 %v59, %v223
    %225 = vmatmul.f32.gmra.mxu0 %v105
    %v226 = vpop.f32.mrf.mxu0
    %v227 = vadd.f32 %v59, %v226
    %228 = vmatmul.f32.gmra.mxu0 %v108
    %v229 = vpop.f32.mrf.mxu0
    %v230 = vadd.f32 %v59, %v229
    %231 = vmatmul.f32.gmra.mxu0 %v111
    %v232 = vpop.f32.mrf.mxu0
    %v233 = vadd.f32 %v59, %v232
    %234 = vmatmul.f32.gmra.mxu0 %v114
    %v235 = vpop.f32.mrf.mxu0
    %v236 = vadd.f32 %v59, %v235
    %237 = vmatmul.f32.gmra.mxu0 %v117
    %v238 = vpop.f32.mrf.mxu0
    %v239 = vadd.f32 %v59, %v238
    %240 = vmatmul.f32.gmra.mxu0 %v120
    %v241 = vpop.f32.mrf.mxu0
    %v242 = vadd.f32 %v59, %v241
    %243 = vmatmul.f32.gmra.mxu0 %v123
    %v244 = vpop.f32.mrf.mxu0
    %v245 = vadd.f32 %v59, %v244
    %246 = vmatmul.f32.gmra.mxu0 %v126
    %v247 = vpop.f32.mrf.mxu0
    %v248 = vadd.f32 %v59, %v247
    %249 = vmatmul.f32.gmra.mxu0 %v129
    %v250 = vpop.f32.mrf.mxu0
    %v251 = vadd.f32 %v59, %v250
    %252 = vmatmul.f32.gmra.mxu0 %v132
    %v253 = vpop.f32.mrf.mxu0
    %v254 = vadd.f32 %v59, %v253
    %255 = vmatmul.f32.gmra.mxu0 %v135
    %v256 = vpop.f32.mrf.mxu0
    %v257 = vadd.f32 %v59, %v256
    %258 = vmatmul.f32.gmra.mxu0 %v138
    %v259 = vpop.f32.mrf.mxu0
    %v260 = vadd.f32 %v59, %v259
    %261 = vmatmul.f32.gmra.mxu0 %v141
    %v262 = vpop.f32.mrf.mxu0
    %v263 = vadd.f32 %v59, %v262
    %264 = vmatmul.f32.gmra.mxu0 %v144
    %v265 = vpop.f32.mrf.mxu0
    %v266 = vadd.f32 %v59, %v265
    %267 = vmatmul.f32.gmra.mxu0 %v147
    %v268 = vpop.f32.mrf.mxu0
    %v269 = vadd.f32 %v59, %v268
    %270 = vmatmul.f32.gmra.mxu0 %v150
    %v271 = vpop.f32.mrf.mxu0
    %v272 = vadd.f32 %v59, %v271
    %273 = vmatmul.f32.gmra.mxu0 %v153
    %v274 = vpop.f32.mrf.mxu0
    %v275 = vadd.f32 %v59, %v274
    %276 = vmatmul.f32.gmra.mxu0 %v156
    %v277 = vpop.f32.mrf.mxu0
    %v278 = vadd.f32 %v59, %v277
    %279 = vmatmul.f32.gmra.mxu0 %v159
    %v280 = vpop.f32.mrf.mxu0
    %v281 = vadd.f32 %v59, %v280
    %282 = vmatmul.f32.gmra.mxu0 %v162
    %v283 = vpop.f32.mrf.mxu0
    %v284 = vadd.f32 %v59, %v283
    %285 = vmatmul.f32.gmra.mxu0 %v165
    %v286 = vpop.f32.mrf.mxu0
    %v287 = vadd.f32 %v59, %v286
    %288 = vdwg.mxu0
    %289 = vst.msk [vmem:[#allocation2] sm:$0xff] %vm61, %v185
    %290 = vst.msk [vmem:[#allocation2 + $0x8] sm:$0xff] %vm61, %v188
    %291 = vst.msk [vmem:[#allocation2 + $0x10] sm:$0xff] %vm61, %v191
    %292 = vst.msk [vmem:[#allocation2 + $0x18] sm:$0xff] %vm61, %v194
    %293 = vst.msk [vmem:[#allocation2 + $0x20] sm:$0xff] %vm61, %v197
    %294 = vst.msk [vmem:[#allocation2 + $0x28] sm:$0xff] %vm61, %v200
    %295 = vst.msk [vmem:[#allocation2 + $0x30] sm:$0xff] %vm61, %v203
    %296 = vst.msk [vmem:[#allocation2 + $0x38] sm:$0xff] %vm61, %v206
    %297 = vst.msk [vmem:[#allocation2 + $0x40] sm:$0xff] %vm61, %v209
    %298 = vst.msk [vmem:[#allocation2 + $0x48] sm:$0xff] %vm61, %v212
    %299 = vst.msk [vmem:[#allocation2 + $0x50] sm:$0xff] %vm61, %v215
    %300 = vst.msk [vmem:[#allocation2 + $0x58] sm:$0xff] %vm61, %v218
    %301 = vst.msk [vmem:[#allocation2 + $0x60] sm:$0xff] %vm61, %v221
    %302 = vst.msk [vmem:[#allocation2 + $0x68] sm:$0xff] %vm61, %v224
    %303 = vst.msk [vmem:[#allocation2 + $0x70] sm:$0xff] %vm61, %v227
    %304 = vst.msk [vmem:[#allocation2 + $0x78] sm:$0xff] %vm61, %v230
    %305 = vst.msk [vmem:[#allocation2 + $0x80] sm:$0xff] %vm61, %v233
    %306 = vst.msk [vmem:[#allocation2 + $0x88] sm:$0xff] %vm61, %v236
    %307 = vst.msk [vmem:[#allocation2 + $0x90] sm:$0xff] %vm61, %v239
    %308 = vst.msk [vmem:[#allocation2 + $0x98] sm:$0xff] %vm61, %v242
    %309 = vst.msk [vmem:[#allocation2 + $0xa0] sm:$0xff] %vm61, %v245
    %310 = vst.msk [vmem:[#allocation2 + $0xa8] sm:$0xff] %vm61, %v248
    %311 = vst.msk [vmem:[#allocation2 + $0xb0] sm:$0xff] %vm61, %v251
    %312 = vst.msk [vmem:[#allocation2 + $0xb8] sm:$0xff] %vm61, %v254
    %313 = vst.msk [vmem:[#allocation2 + $0xc0] sm:$0xff] %vm61, %v257
    %314 = vst.msk [vmem:[#allocation2 + $0xc8] sm:$0xff] %vm61, %v260
    %315 = vst.msk [vmem:[#allocation2 + $0xd0] sm:$0xff] %vm61, %v263
    %316 = vst.msk [vmem:[#allocation2 + $0xd8] sm:$0xff] %vm61, %v266
    %317 = vst.msk [vmem:[#allocation2 + $0xe0] sm:$0xff] %vm61, %v269
    %318 = vst.msk [vmem:[#allocation2 + $0xe8] sm:$0xff] %vm61, %v272
    %319 = vst.msk [vmem:[#allocation2 + $0xf0] sm:$0xff] %vm61, %v275
    %320 = vst.msk [vmem:[#allocation2 + $0xf8] sm:$0xff] %vm61, %v278
    %321 = vst.msk [vmem:[#allocation2 + $0x100] sm:$0xff] %vm61, %v281
    %322 = vst.msk [vmem:[#allocation2 + $0x108] sm:$0xff] %vm61, %v284
    %323 = vst.msk [vmem:[#allocation2 + $0x110] sm:$0xff] %vm61, %v287
    %v324 = vld [vmem:[%s2] sm:$0xff]
    %v325 = vld [vmem:[%s2 + $0x8] sm:$0xff]
    %v326 = vld [vmem:[%s2 + $0x10] sm:$0xff]
    %v327 = vld [vmem:[%s2 + $0x18] sm:$0xff]
    %v328 = vld [vmem:[#allocation2] sm:$0xff]
    %v330 = vsel %vm61, 0.0, 0
    %332 = vmatpush.msra.mxu0 0.0
    %333 = vmatpush.msra.mxu0 0.0
    %334 = vmatpush.msra.mxu0 0.0
    %335 = vmatpush.msra.mxu0 0.0
    %336 = vmatpush.msra.mxu0 0.0
    %337 = vmatpush.msra.mxu0 0.0
    %338 = vmatpush.msra.mxu0 0.0
    %339 = vmatpush.msra.mxu0 0.0
    %340 = vmatpush.msra.mxu0 0.0
    %341 = vmatpush.msra.mxu0 0.0
    %342 = vmatpush.msra.mxu0 0.0
    %343 = vmatpush.msra.mxu0 0.0
    %344 = vmatpush.msra.mxu0 %v327
    %345 = vmatpush.msra.mxu0 %v326
    %346 = vmatpush.msra.mxu0 %v325
    %347 = vmatpush.msra.mxu0 %v324
    %348 = vmatmul.f32.gmra.mxu0 %v330
    %v349 = vpop.f32.mrf.mxu0
    %v350 = vadd.f32 0.0, %v349
    %351 = vdwg.mxu0
    %v352 = vadd.f32 %v328, %v350
    %v353 = vmax.f32 %v352, 0.0
    %v354 = vld [vmem:[#allocation2 + $0x8] sm:$0xff]
    %v356 = vsel %vm61, %v353, 0
    %358 = vmatpush.msra.mxu0 0.0
    %359 = vmatpush.msra.mxu0 0.0
    %360 = vmatpush.msra.mxu0 0.0
    %361 = vmatpush.msra.mxu0 0.0
    %362 = vmatpush.msra.mxu0 0.0
    %363 = vmatpush.msra.mxu0 0.0
    %364 = vmatpush.msra.mxu0 0.0
    %365 = vmatpush.msra.mxu0 0.0
    %366 = vmatpush.msra.mxu0 0.0
    %367 = vmatpush.msra.mxu0 0.0
    %368 = vmatpush.msra.mxu0 0.0
    %369 = vmatpush.msra.mxu0 0.0
    %370 = vmatpush.msra.mxu0 %v327
    %371 = vmatpush.msra.mxu0 %v326
    %372 = vmatpush.msra.mxu0 %v325
    %373 = vmatpush.msra.mxu0 %v324
    %374 = vmatmul.f32.gmra.mxu0 %v356
    %v375 = vpop.f32.mrf.mxu0
    %v376 = vadd.f32 0.0, %v375
    %377 = vdwg.mxu0
    %v378 = vadd.f32 %v354, %v376
    %v379 = vmax.f32 %v378, 0.0
    %v380 = vld [vmem:[#allocation2 + $0x10] sm:$0xff]
    %v382 = vsel %vm61, %v379, 0
    %384 = vmatpush.msra.mxu0 0.0
    %385 = vmatpush.msra.mxu0 0.0
    %386 = vmatpush.msra.mxu0 0.0
    %387 = vmatpush.msra.mxu0 0.0
    %388 = vmatpush.msra.mxu0 0.0
    %389 = vmatpush.msra.mxu0 0.0
    %390 = vmatpush.msra.mxu0 0.0
    %391 = vmatpush.msra.mxu0 0.0
    %392 = vmatpush.msra.mxu0 0.0
    %393 = vmatpush.msra.mxu0 0.0
    %394 = vmatpush.msra.mxu0 0.0
    %395 = vmatpush.msra.mxu0 0.0
    %396 = vmatpush.msra.mxu0 %v327
    %397 = vmatpush.msra.mxu0 %v326
    %398 = vmatpush.msra.mxu0 %v325
    %399 = vmatpush.msra.mxu0 %v324
    %400 = vmatmul.f32.gmra.mxu0 %v382
    %v401 = vpop.f32.mrf.mxu0
    %v402 = vadd.f32 0.0, %v401
    %403 = vdwg.mxu0
    %v404 = vadd.f32 %v380, %v402
    %v405 = vmax.f32 %v404, 0.0
    %v406 = vld [vmem:[#allocation2 + $0x18] sm:$0xff]
    %v408 = vsel %vm61, %v405, 0
    %410 = vmatpush.msra.mxu0 0.0
    %411 = vmatpush.msra.mxu0 0.0
    %412 = vmatpush.msra.mxu0 0.0
    %413 = vmatpush.msra.mxu0 0.0
    %414 = vmatpush.msra.mxu0 0.0
    %415 = vmatpush.msra.mxu0 0.0
    %416 = vmatpush.msra.mxu0 0.0
    %417 = vmatpush.msra.mxu0 0.0
    %418 = vmatpush.msra.mxu0 0.0
    %419 = vmatpush.msra.mxu0 0.0
    %420 = vmatpush.msra.mxu0 0.0
    %421 = vmatpush.msra.mxu0 0.0
    %422 = vmatpush.msra.mxu0 %v327
    %423 = vmatpush.msra.mxu0 %v326
    %424 = vmatpush.msra.mxu0 %v325
    %425 = vmatpush.msra.mxu0 %v324
    %426 = vmatmul.f32.gmra.mxu0 %v408
    %v427 = vpop.f32.mrf.mxu0
    %v428 = vadd.f32 0.0, %v427
    %429 = vdwg.mxu0
    %v430 = vadd.f32 %v406, %v428
    %v431 = vmax.f32 %v430, 0.0
    %v432 = vld [vmem:[#allocation2 + $0x20] sm:$0xff]
    %v434 = vsel %vm61, %v431, 0
    %436 = vmatpush.msra.mxu0 0.0
    %437 = vmatpush.msra.mxu0 0.0
    %438 = vmatpush.msra.mxu0 0.0
    %439 = vmatpush.msra.mxu0 0.0
    %440 = vmatpush.msra.mxu0 0.0
    %441 = vmatpush.msra.mxu0 0.0
    %442 = vmatpush.msra.mxu0 0.0
    %443 = vmatpush.msra.mxu0 0.0
    %444 = vmatpush.msra.mxu0 0.0
    %445 = vmatpush.msra.mxu0 0.0
    %446 = vmatpush.msra.mxu0 0.0
    %447 = vmatpush.msra.mxu0 0.0
    %448 = vmatpush.msra.mxu0 %v327
    %449 = vmatpush.msra.mxu0 %v326
    %450 = vmatpush.msra.mxu0 %v325
    %451 = vmatpush.msra.mxu0 %v324
    %452 = vmatmul.f32.gmra.mxu0 %v434
    %v453 = vpop.f32.mrf.mxu0
    %v454 = vadd.f32 0.0, %v453
    %455 = vdwg.mxu0
    %v456 = vadd.f32 %v432, %v454
    %v457 = vmax.f32 %v456, 0.0
    %v458 = vld [vmem:[#allocation2 + $0x28] sm:$0xff]
    %v460 = vsel %vm61, %v457, 0
    %462 = vmatpush.msra.mxu0 0.0
    %463 = vmatpush.msra.mxu0 0.0
    %464 = vmatpush.msra.mxu0 0.0
    %465 = vmatpush.msra.mxu0 0.0
    %466 = vmatpush.msra.mxu0 0.0
    %467 = vmatpush.msra.mxu0 0.0
    %468 = vmatpush.msra.mxu0 0.0
    %469 = vmatpush.msra.mxu0 0.0
    %470 = vmatpush.msra.mxu0 0.0
    %471 = vmatpush.msra.mxu0 0.0
    %472 = vmatpush.msra.mxu0 0.0
    %473 = vmatpush.msra.mxu0 0.0
    %474 = vmatpush.msra.mxu0 %v327
    %475 = vmatpush.msra.mxu0 %v326
    %476 = vmatpush.msra.mxu0 %v325
    %477 = vmatpush.msra.mxu0 %v324
    %478 = vmatmul.f32.gmra.mxu0 %v460
    %v479 = vpop.f32.mrf.mxu0
    %v480 = vadd.f32 0.0, %v479
    %481 = vdwg.mxu0
    %v482 = vadd.f32 %v458, %v480
    %v483 = vmax.f32 %v482, 0.0
    %v484 = vld [vmem:[#allocation2 + $0x30] sm:$0xff]
    %v486 = vsel %vm61, %v483, 0
    %488 = vmatpush.msra.mxu0 0.0
    %489 = vmatpush.msra.mxu0 0.0
    %490 = vmatpush.msra.mxu0 0.0
    %491 = vmatpush.msra.mxu0 0.0
    %492 = vmatpush.msra.mxu0 0.0
    %493 = vmatpush.msra.mxu0 0.0
    %494 = vmatpush.msra.mxu0 0.0
    %495 = vmatpush.msra.mxu0 0.0
    %496 = vmatpush.msra.mxu0 0.0
    %497 = vmatpush.msra.mxu0 0.0
    %498 = vmatpush.msra.mxu0 0.0
    %499 = vmatpush.msra.mxu0 0.0
    %500 = vmatpush.msra.mxu0 %v327
    %501 = vmatpush.msra.mxu0 %v326
    %502 = vmatpush.msra.mxu0 %v325
    %503 = vmatpush.msra.mxu0 %v324
    %504 = vmatmul.f32.gmra.mxu0 %v486
    %v505 = vpop.f32.mrf.mxu0
    %v506 = vadd.f32 0.0, %v505
    %507 = vdwg.mxu0
    %v508 = vadd.f32 %v484, %v506
    %v509 = vmax.f32 %v508, 0.0
    %v510 = vld [vmem:[#allocation2 + $0x38] sm:$0xff]
    %v512 = vsel %vm61, %v509, 0
    %514 = vmatpush.msra.mxu0 0.0
    %515 = vmatpush.msra.mxu0 0.0
    %516 = vmatpush.msra.mxu0 0.0
    %517 = vmatpush.msra.mxu0 0.0
    %518 = vmatpush.msra.mxu0 0.0
    %519 = vmatpush.msra.mxu0 0.0
    %520 = vmatpush.msra.mxu0 0.0
    %521 = vmatpush.msra.mxu0 0.0
    %522 = vmatpush.msra.mxu0 0.0
    %523 = vmatpush.msra.mxu0 0.0
    %524 = vmatpush.msra.mxu0 0.0
    %525 = vmatpush.msra.mxu0 0.0
    %526 = vmatpush.msra.mxu0 %v327
    %527 = vmatpush.msra.mxu0 %v326
    %528 = vmatpush.msra.mxu0 %v325
    %529 = vmatpush.msra.mxu0 %v324
    %530 = vmatmul.f32.gmra.mxu0 %v512
    %v531 = vpop.f32.mrf.mxu0
    %v532 = vadd.f32 0.0, %v531
    %533 = vdwg.mxu0
    %v534 = vadd.f32 %v510, %v532
    %v535 = vmax.f32 %v534, 0.0
    %v536 = vld [vmem:[#allocation2 + $0x40] sm:$0xff]
    %v538 = vsel %vm61, %v535, 0
    %540 = vmatpush.msra.mxu0 0.0
    %541 = vmatpush.msra.mxu0 0.0
    %542 = vmatpush.msra.mxu0 0.0
    %543 = vmatpush.msra.mxu0 0.0
    %544 = vmatpush.msra.mxu0 0.0
    %545 = vmatpush.msra.mxu0 0.0
    %546 = vmatpush.msra.mxu0 0.0
    %547 = vmatpush.msra.mxu0 0.0
    %548 = vmatpush.msra.mxu0 0.0
    %549 = vmatpush.msra.mxu0 0.0
    %550 = vmatpush.msra.mxu0 0.0
    %551 = vmatpush.msra.mxu0 0.0
    %552 = vmatpush.msra.mxu0 %v327
    %553 = vmatpush.msra.mxu0 %v326
    %554 = vmatpush.msra.mxu0 %v325
    %555 = vmatpush.msra.mxu0 %v324
    %556 = vmatmul.f32.gmra.mxu0 %v538
    %v557 = vpop.f32.mrf.mxu0
    %v558 = vadd.f32 0.0, %v557
    %559 = vdwg.mxu0
    %v560 = vadd.f32 %v536, %v558
    %v561 = vmax.f32 %v560, 0.0
    %v562 = vld [vmem:[#allocation2 + $0x48] sm:$0xff]
    %v564 = vsel %vm61, %v561, 0
    %566 = vmatpush.msra.mxu0 0.0
    %567 = vmatpush.msra.mxu0 0.0
    %568 = vmatpush.msra.mxu0 0.0
    %569 = vmatpush.msra.mxu0 0.0
    %570 = vmatpush.msra.mxu0 0.0
    %571 = vmatpush.msra.mxu0 0.0
    %572 = vmatpush.msra.mxu0 0.0
    %573 = vmatpush.msra.mxu0 0.0
    %574 = vmatpush.msra.mxu0 0.0
    %575 = vmatpush.msra.mxu0 0.0
    %576 = vmatpush.msra.mxu0 0.0
    %577 = vmatpush.msra.mxu0 0.0
    %578 = vmatpush.msra.mxu0 %v327
    %579 = vmatpush.msra.mxu0 %v326
    %580 = vmatpush.msra.mxu0 %v325
    %581 = vmatpush.msra.mxu0 %v324
    %582 = vmatmul.f32.gmra.mxu0 %v564
    %v583 = vpop.f32.mrf.mxu0
    %v584 = vadd.f32 0.0, %v583
    %585 = vdwg.mxu0
    %v586 = vadd.f32 %v562, %v584
    %v587 = vmax.f32 %v586, 0.0
    %v588 = vld [vmem:[#allocation2 + $0x50] sm:$0xff]
    %v590 = vsel %vm61, %v587, 0
    %592 = vmatpush.msra.mxu0 0.0
    %593 = vmatpush.msra.mxu0 0.0
    %594 = vmatpush.msra.mxu0 0.0
    %595 = vmatpush.msra.mxu0 0.0
    %596 = vmatpush.msra.mxu0 0.0
    %597 = vmatpush.msra.mxu0 0.0
    %598 = vmatpush.msra.mxu0 0.0
    %599 = vmatpush.msra.mxu0 0.0
    %600 = vmatpush.msra.mxu0 0.0
    %601 = vmatpush.msra.mxu0 0.0
    %602 = vmatpush.msra.mxu0 0.0
    %603 = vmatpush.msra.mxu0 0.0
    %604 = vmatpush.msra.mxu0 %v327
    %605 = vmatpush.msra.mxu0 %v326
    %606 = vmatpush.msra.mxu0 %v325
    %607 = vmatpush.msra.mxu0 %v324
    %608 = vmatmul.f32.gmra.mxu0 %v590
    %v609 = vpop.f32.mrf.mxu0
    %v610 = vadd.f32 0.0, %v609
    %611 = vdwg.mxu0
    %v612 = vadd.f32 %v588, %v610
    %v613 = vmax.f32 %v612, 0.0
    %v614 = vld [vmem:[#allocation2 + $0x58] sm:$0xff]
    %v616 = vsel %vm61, %v613, 0
    %618 = vmatpush.msra.mxu0 0.0
    %619 = vmatpush.msra.mxu0 0.0
    %620 = vmatpush.msra.mxu0 0.0
    %621 = vmatpush.msra.mxu0 0.0
    %622 = vmatpush.msra.mxu0 0.0
    %623 = vmatpush.msra.mxu0 0.0
    %624 = vmatpush.msra.mxu0 0.0
    %625 = vmatpush.msra.mxu0 0.0
    %626 = vmatpush.msra.mxu0 0.0
    %627 = vmatpush.msra.mxu0 0.0
    %628 = vmatpush.msra.mxu0 0.0
    %629 = vmatpush.msra.mxu0 0.0
    %630 = vmatpush.msra.mxu0 %v327
    %631 = vmatpush.msra.mxu0 %v326
    %632 = vmatpush.msra.mxu0 %v325
    %633 = vmatpush.msra.mxu0 %v324
    %634 = vmatmul.f32.gmra.mxu0 %v616
    %v635 = vpop.f32.mrf.mxu0
    %v636 = vadd.f32 0.0, %v635
    %637 = vdwg.mxu0
    %v638 = vadd.f32 %v614, %v636
    %v639 = vmax.f32 %v638, 0.0
    %v640 = vld [vmem:[#allocation2 + $0x60] sm:$0xff]
    %v642 = vsel %vm61, %v639, 0
    %644 = vmatpush.msra.mxu0 0.0
    %645 = vmatpush.msra.mxu0 0.0
    %646 = vmatpush.msra.mxu0 0.0
    %647 = vmatpush.msra.mxu0 0.0
    %648 = vmatpush.msra.mxu0 0.0
    %649 = vmatpush.msra.mxu0 0.0
    %650 = vmatpush.msra.mxu0 0.0
    %651 = vmatpush.msra.mxu0 0.0
    %652 = vmatpush.msra.mxu0 0.0
    %653 = vmatpush.msra.mxu0 0.0
    %654 = vmatpush.msra.mxu0 0.0
    %655 = vmatpush.msra.mxu0 0.0
    %656 = vmatpush.msra.mxu0 %v327
    %657 = vmatpush.msra.mxu0 %v326
    %658 = vmatpush.msra.mxu0 %v325
    %659 = vmatpush.msra.mxu0 %v324
    %660 = vmatmul.f32.gmra.mxu0 %v642
    %v661 = vpop.f32.mrf.mxu0
    %v662 = vadd.f32 0.0, %v661
    %663 = vdwg.mxu0
    %v664 = vadd.f32 %v640, %v662
    %v665 = vmax.f32 %v664, 0.0
    %v666 = vld [vmem:[#allocation2 + $0x68] sm:$0xff]
    %v668 = vsel %vm61, %v665, 0
    %670 = vmatpush.msra.mxu0 0.0
    %671 = vmatpush.msra.mxu0 0.0
    %672 = vmatpush.msra.mxu0 0.0
    %673 = vmatpush.msra.mxu0 0.0
    %674 = vmatpush.msra.mxu0 0.0
    %675 = vmatpush.msra.mxu0 0.0
    %676 = vmatpush.msra.mxu0 0.0
    %677 = vmatpush.msra.mxu0 0.0
    %678 = vmatpush.msra.mxu0 0.0
    %679 = vmatpush.msra.mxu0 0.0
    %680 = vmatpush.msra.mxu0 0.0
    %681 = vmatpush.msra.mxu0 0.0
    %682 = vmatpush.msra.mxu0 %v327
    %683 = vmatpush.msra.mxu0 %v326
    %684 = vmatpush.msra.mxu0 %v325
    %685 = vmatpush.msra.mxu0 %v324
    %686 = vmatmul.f32.gmra.mxu0 %v668
    %v687 = vpop.f32.mrf.mxu0
    %v688 = vadd.f32 0.0, %v687
    %689 = vdwg.mxu0
    %v690 = vadd.f32 %v666, %v688
    %v691 = vmax.f32 %v690, 0.0
    %v692 = vld [vmem:[#allocation2 + $0x70] sm:$0xff]
    %v694 = vsel %vm61, %v691, 0
    %696 = vmatpush.msra.mxu0 0.0
    %697 = vmatpush.msra.mxu0 0.0
    %698 = vmatpush.msra.mxu0 0.0
    %699 = vmatpush.msra.mxu0 0.0
    %700 = vmatpush.msra.mxu0 0.0
    %701 = vmatpush.msra.mxu0 0.0
    %702 = vmatpush.msra.mxu0 0.0
    %703 = vmatpush.msra.mxu0 0.0
    %704 = vmatpush.msra.mxu0 0.0
    %705 = vmatpush.msra.mxu0 0.0
    %706 = vmatpush.msra.mxu0 0.0
    %707 = vmatpush.msra.mxu0 0.0
    %708 = vmatpush.msra.mxu0 %v327
    %709 = vmatpush.msra.mxu0 %v326
    %710 = vmatpush.msra.mxu0 %v325
    %711 = vmatpush.msra.mxu0 %v324
    %712 = vmatmul.f32.gmra.mxu0 %v694
    %v713 = vpop.f32.mrf.mxu0
    %v714 = vadd.f32 0.0, %v713
    %715 = vdwg.mxu0
    %v716 = vadd.f32 %v692, %v714
    %v717 = vmax.f32 %v716, 0.0
    %v718 = vld [vmem:[#allocation2 + $0x78] sm:$0xff]
    %v720 = vsel %vm61, %v717, 0
    %722 = vmatpush.msra.mxu0 0.0
    %723 = vmatpush.msra.mxu0 0.0
    %724 = vmatpush.msra.mxu0 0.0
    %725 = vmatpush.msra.mxu0 0.0
    %726 = vmatpush.msra.mxu0 0.0
    %727 = vmatpush.msra.mxu0 0.0
    %728 = vmatpush.msra.mxu0 0.0
    %729 = vmatpush.msra.mxu0 0.0
    %730 = vmatpush.msra.mxu0 0.0
    %731 = vmatpush.msra.mxu0 0.0
    %732 = vmatpush.msra.mxu0 0.0
    %733 = vmatpush.msra.mxu0 0.0
    %734 = vmatpush.msra.mxu0 %v327
    %735 = vmatpush.msra.mxu0 %v326
    %736 = vmatpush.msra.mxu0 %v325
    %737 = vmatpush.msra.mxu0 %v324
    %738 = vmatmul.f32.gmra.mxu0 %v720
    %v739 = vpop.f32.mrf.mxu0
    %v740 = vadd.f32 0.0, %v739
    %741 = vdwg.mxu0
    %v742 = vadd.f32 %v718, %v740
    %v743 = vmax.f32 %v742, 0.0
    %v744 = vld [vmem:[#allocation2 + $0x80] sm:$0xff]
    %v746 = vsel %vm61, %v743, 0
    %748 = vmatpush.msra.mxu0 0.0
    %749 = vmatpush.msra.mxu0 0.0
    %750 = vmatpush.msra.mxu0 0.0
    %751 = vmatpush.msra.mxu0 0.0
    %752 = vmatpush.msra.mxu0 0.0
    %753 = vmatpush.msra.mxu0 0.0
    %754 = vmatpush.msra.mxu0 0.0
    %755 = vmatpush.msra.mxu0 0.0
    %756 = vmatpush.msra.mxu0 0.0
    %757 = vmatpush.msra.mxu0 0.0
    %758 = vmatpush.msra.mxu0 0.0
    %759 = vmatpush.msra.mxu0 0.0
    %760 = vmatpush.msra.mxu0 %v327
    %761 = vmatpush.msra.mxu0 %v326
    %762 = vmatpush.msra.mxu0 %v325
    %763 = vmatpush.msra.mxu0 %v324
    %764 = vmatmul.f32.gmra.mxu0 %v746
    %v765 = vpop.f32.mrf.mxu0
    %v766 = vadd.f32 0.0, %v765
    %767 = vdwg.mxu0
    %v768 = vadd.f32 %v744, %v766
    %v769 = vmax.f32 %v768, 0.0
    %v770 = vld [vmem:[#allocation2 + $0x88] sm:$0xff]
    %v772 = vsel %vm61, %v769, 0
    %774 = vmatpush.msra.mxu0 0.0
    %775 = vmatpush.msra.mxu0 0.0
    %776 = vmatpush.msra.mxu0 0.0
    %777 = vmatpush.msra.mxu0 0.0
    %778 = vmatpush.msra.mxu0 0.0
    %779 = vmatpush.msra.mxu0 0.0
    %780 = vmatpush.msra.mxu0 0.0
    %781 = vmatpush.msra.mxu0 0.0
    %782 = vmatpush.msra.mxu0 0.0
    %783 = vmatpush.msra.mxu0 0.0
    %784 = vmatpush.msra.mxu0 0.0
    %785 = vmatpush.msra.mxu0 0.0
    %786 = vmatpush.msra.mxu0 %v327
    %787 = vmatpush.msra.mxu0 %v326
    %788 = vmatpush.msra.mxu0 %v325
    %789 = vmatpush.msra.mxu0 %v324
    %790 = vmatmul.f32.gmra.mxu0 %v772
    %v791 = vpop.f32.mrf.mxu0
    %v792 = vadd.f32 0.0, %v791
    %793 = vdwg.mxu0
    %v794 = vadd.f32 %v770, %v792
    %v795 = vmax.f32 %v794, 0.0
    %v796 = vld [vmem:[#allocation2 + $0x90] sm:$0xff]
    %v798 = vsel %vm61, %v795, 0
    %800 = vmatpush.msra.mxu0 0.0
    %801 = vmatpush.msra.mxu0 0.0
    %802 = vmatpush.msra.mxu0 0.0
    %803 = vmatpush.msra.mxu0 0.0
    %804 = vmatpush.msra.mxu0 0.0
    %805 = vmatpush.msra.mxu0 0.0
    %806 = vmatpush.msra.mxu0 0.0
    %807 = vmatpush.msra.mxu0 0.0
    %808 = vmatpush.msra.mxu0 0.0
    %809 = vmatpush.msra.mxu0 0.0
    %810 = vmatpush.msra.mxu0 0.0
    %811 = vmatpush.msra.mxu0 0.0
    %812 = vmatpush.msra.mxu0 %v327
    %813 = vmatpush.msra.mxu0 %v326
    %814 = vmatpush.msra.mxu0 %v325
    %815 = vmatpush.msra.mxu0 %v324
    %816 = vmatmul.f32.gmra.mxu0 %v798
    %v817 = vpop.f32.mrf.mxu0
    %v818 = vadd.f32 0.0, %v817
    %819 = vdwg.mxu0
    %v820 = vadd.f32 %v796, %v818
    %v821 = vmax.f32 %v820, 0.0
    %v822 = vld [vmem:[#allocation2 + $0x98] sm:$0xff]
    %v824 = vsel %vm61, %v821, 0
    %826 = vmatpush.msra.mxu0 0.0
    %827 = vmatpush.msra.mxu0 0.0
    %828 = vmatpush.msra.mxu0 0.0
    %829 = vmatpush.msra.mxu0 0.0
    %830 = vmatpush.msra.mxu0 0.0
    %831 = vmatpush.msra.mxu0 0.0
    %832 = vmatpush.msra.mxu0 0.0
    %833 = vmatpush.msra.mxu0 0.0
    %834 = vmatpush.msra.mxu0 0.0
    %835 = vmatpush.msra.mxu0 0.0
    %836 = vmatpush.msra.mxu0 0.0
    %837 = vmatpush.msra.mxu0 0.0
    %838 = vmatpush.msra.mxu0 %v327
    %839 = vmatpush.msra.mxu0 %v326
    %840 = vmatpush.msra.mxu0 %v325
    %841 = vmatpush.msra.mxu0 %v324
    %842 = vmatmul.f32.gmra.mxu0 %v824
    %v843 = vpop.f32.mrf.mxu0
    %v844 = vadd.f32 0.0, %v843
    %845 = vdwg.mxu0
    %v846 = vadd.f32 %v822, %v844
    %v847 = vmax.f32 %v846, 0.0
    %v848 = vld [vmem:[#allocation2 + $0xa0] sm:$0xff]
    %v850 = vsel %vm61, %v847, 0
    %852 = vmatpush.msra.mxu0 0.0
    %853 = vmatpush.msra.mxu0 0.0
    %854 = vmatpush.msra.mxu0 0.0
    %855 = vmatpush.msra.mxu0 0.0
    %856 = vmatpush.msra.mxu0 0.0
    %857 = vmatpush.msra.mxu0 0.0
    %858 = vmatpush.msra.mxu0 0.0
    %859 = vmatpush.msra.mxu0 0.0
    %860 = vmatpush.msra.mxu0 0.0
    %861 = vmatpush.msra.mxu0 0.0
    %862 = vmatpush.msra.mxu0 0.0
    %863 = vmatpush.msra.mxu0 0.0
    %864 = vmatpush.msra.mxu0 %v327
    %865 = vmatpush.msra.mxu0 %v326
    %866 = vmatpush.msra.mxu0 %v325
    %867 = vmatpush.msra.mxu0 %v324
    %868 = vmatmul.f32.gmra.mxu0 %v850
    %v869 = vpop.f32.mrf.mxu0
    %v870 = vadd.f32 0.0, %v869
    %871 = vdwg.mxu0
    %v872 = vadd.f32 %v848, %v870
    %v873 = vmax.f32 %v872, 0.0
    %v874 = vld [vmem:[#allocation2 + $0xa8] sm:$0xff]
    %v876 = vsel %vm61, %v873, 0
    %878 = vmatpush.msra.mxu0 0.0
    %879 = vmatpush.msra.mxu0 0.0
    %880 = vmatpush.msra.mxu0 0.0
    %881 = vmatpush.msra.mxu0 0.0
    %882 = vmatpush.msra.mxu0 0.0
    %883 = vmatpush.msra.mxu0 0.0
    %884 = vmatpush.msra.mxu0 0.0
    %885 = vmatpush.msra.mxu0 0.0
    %886 = vmatpush.msra.mxu0 0.0
    %887 = vmatpush.msra.mxu0 0.0
    %888 = vmatpush.msra.mxu0 0.0
    %889 = vmatpush.msra.mxu0 0.0
    %890 = vmatpush.msra.mxu0 %v327
    %891 = vmatpush.msra.mxu0 %v326
    %892 = vmatpush.msra.mxu0 %v325
    %893 = vmatpush.msra.mxu0 %v324
    %894 = vmatmul.f32.gmra.mxu0 %v876
    %v895 = vpop.f32.mrf.mxu0
    %v896 = vadd.f32 0.0, %v895
    %897 = vdwg.mxu0
    %v898 = vadd.f32 %v874, %v896
    %v899 = vmax.f32 %v898, 0.0
    %v900 = vld [vmem:[#allocation2 + $0xb0] sm:$0xff]
    %v902 = vsel %vm61, %v899, 0
    %904 = vmatpush.msra.mxu0 0.0
    %905 = vmatpush.msra.mxu0 0.0
    %906 = vmatpush.msra.mxu0 0.0
    %907 = vmatpush.msra.mxu0 0.0
    %908 = vmatpush.msra.mxu0 0.0
    %909 = vmatpush.msra.mxu0 0.0
    %910 = vmatpush.msra.mxu0 0.0
    %911 = vmatpush.msra.mxu0 0.0
    %912 = vmatpush.msra.mxu0 0.0
    %913 = vmatpush.msra.mxu0 0.0
    %914 = vmatpush.msra.mxu0 0.0
    %915 = vmatpush.msra.mxu0 0.0
    %916 = vmatpush.msra.mxu0 %v327
    %917 = vmatpush.msra.mxu0 %v326
    %918 = vmatpush.msra.mxu0 %v325
    %919 = vmatpush.msra.mxu0 %v324
    %920 = vmatmul.f32.gmra.mxu0 %v902
    %v921 = vpop.f32.mrf.mxu0
    %v922 = vadd.f32 0.0, %v921
    %923 = vdwg.mxu0
    %v924 = vadd.f32 %v900, %v922
    %v925 = vmax.f32 %v924, 0.0
    %v926 = vld [vmem:[#allocation2 + $0xb8] sm:$0xff]
    %v928 = vsel %vm61, %v925, 0
    %930 = vmatpush.msra.mxu0 0.0
    %931 = vmatpush.msra.mxu0 0.0
    %932 = vmatpush.msra.mxu0 0.0
    %933 = vmatpush.msra.mxu0 0.0
    %934 = vmatpush.msra.mxu0 0.0
    %935 = vmatpush.msra.mxu0 0.0
    %936 = vmatpush.msra.mxu0 0.0
    %937 = vmatpush.msra.mxu0 0.0
    %938 = vmatpush.msra.mxu0 0.0
    %939 = vmatpush.msra.mxu0 0.0
    %940 = vmatpush.msra.mxu0 0.0
    %941 = vmatpush.msra.mxu0 0.0
    %942 = vmatpush.msra.mxu0 %v327
    %943 = vmatpush.msra.mxu0 %v326
    %944 = vmatpush.msra.mxu0 %v325
    %945 = vmatpush.msra.mxu0 %v324
    %946 = vmatmul.f32.gmra.mxu0 %v928
    %v947 = vpop.f32.mrf.mxu0
    %v948 = vadd.f32 0.0, %v947
    %949 = vdwg.mxu0
    %v950 = vadd.f32 %v926, %v948
    %v951 = vmax.f32 %v950, 0.0
    %v952 = vld [vmem:[#allocation2 + $0xc0] sm:$0xff]
    %v954 = vsel %vm61, %v951, 0
    %956 = vmatpush.msra.mxu0 0.0
    %957 = vmatpush.msra.mxu0 0.0
    %958 = vmatpush.msra.mxu0 0.0
    %959 = vmatpush.msra.mxu0 0.0
    %960 = vmatpush.msra.mxu0 0.0
    %961 = vmatpush.msra.mxu0 0.0
    %962 = vmatpush.msra.mxu0 0.0
    %963 = vmatpush.msra.mxu0 0.0
    %964 = vmatpush.msra.mxu0 0.0
    %965 = vmatpush.msra.mxu0 0.0
    %966 = vmatpush.msra.mxu0 0.0
    %967 = vmatpush.msra.mxu0 0.0
    %968 = vmatpush.msra.mxu0 %v327
    %969 = vmatpush.msra.mxu0 %v326
    %970 = vmatpush.msra.mxu0 %v325
    %971 = vmatpush.msra.mxu0 %v324
    %972 = vmatmul.f32.gmra.mxu0 %v954
    %v973 = vpop.f32.mrf.mxu0
    %v974 = vadd.f32 0.0, %v973
    %975 = vdwg.mxu0
    %v976 = vadd.f32 %v952, %v974
    %v977 = vmax.f32 %v976, 0.0
    %v978 = vld [vmem:[#allocation2 + $0xc8] sm:$0xff]
    %v980 = vsel %vm61, %v977, 0
    %982 = vmatpush.msra.mxu0 0.0
    %983 = vmatpush.msra.mxu0 0.0
    %984 = vmatpush.msra.mxu0 0.0
    %985 = vmatpush.msra.mxu0 0.0
    %986 = vmatpush.msra.mxu0 0.0
    %987 = vmatpush.msra.mxu0 0.0
    %988 = vmatpush.msra.mxu0 0.0
    %989 = vmatpush.msra.mxu0 0.0
    %990 = vmatpush.msra.mxu0 0.0
    %991 = vmatpush.msra.mxu0 0.0
    %992 = vmatpush.msra.mxu0 0.0
    %993 = vmatpush.msra.mxu0 0.0
    %994 = vmatpush.msra.mxu0 %v327
    %995 = vmatpush.msra.mxu0 %v326
    %996 = vmatpush.msra.mxu0 %v325
    %997 = vmatpush.msra.mxu0 %v324
    %998 = vmatmul.f32.gmra.mxu0 %v980
    %v999 = vpop.f32.mrf.mxu0
    %v1000 = vadd.f32 0.0, %v999
    %1001 = vdwg.mxu0
    %v1002 = vadd.f32 %v978, %v1000
    %v1003 = vmax.f32 %v1002, 0.0
    %v1004 = vld [vmem:[#allocation2 + $0xd0] sm:$0xff]
    %v1006 = vsel %vm61, %v1003, 0
    %1008 = vmatpush.msra.mxu0 0.0
    %1009 = vmatpush.msra.mxu0 0.0
    %1010 = vmatpush.msra.mxu0 0.0
    %1011 = vmatpush.msra.mxu0 0.0
    %1012 = vmatpush.msra.mxu0 0.0
    %1013 = vmatpush.msra.mxu0 0.0
    %1014 = vmatpush.msra.mxu0 0.0
    %1015 = vmatpush.msra.mxu0 0.0
    %1016 = vmatpush.msra.mxu0 0.0
    %1017 = vmatpush.msra.mxu0 0.0
    %1018 = vmatpush.msra.mxu0 0.0
    %1019 = vmatpush.msra.mxu0 0.0
    %1020 = vmatpush.msra.mxu0 %v327
    %1021 = vmatpush.msra.mxu0 %v326
    %1022 = vmatpush.msra.mxu0 %v325
    %1023 = vmatpush.msra.mxu0 %v324
    %1024 = vmatmul.f32.gmra.mxu0 %v1006
    %v1025 = vpop.f32.mrf.mxu0
    %v1026 = vadd.f32 0.0, %v1025
    %1027 = vdwg.mxu0
    %v1028 = vadd.f32 %v1004, %v1026
    %v1029 = vmax.f32 %v1028, 0.0
    %v1030 = vld [vmem:[#allocation2 + $0xd8] sm:$0xff]
    %v1032 = vsel %vm61, %v1029, 0
    %1034 = vmatpush.msra.mxu0 0.0
    %1035 = vmatpush.msra.mxu0 0.0
    %1036 = vmatpush.msra.mxu0 0.0
    %1037 = vmatpush.msra.mxu0 0.0
    %1038 = vmatpush.msra.mxu0 0.0
    %1039 = vmatpush.msra.mxu0 0.0
    %1040 = vmatpush.msra.mxu0 0.0
    %1041 = vmatpush.msra.mxu0 0.0
    %1042 = vmatpush.msra.mxu0 0.0
    %1043 = vmatpush.msra.mxu0 0.0
    %1044 = vmatpush.msra.mxu0 0.0
    %1045 = vmatpush.msra.mxu0 0.0
    %1046 = vmatpush.msra.mxu0 %v327
    %1047 = vmatpush.msra.mxu0 %v326
    %1048 = vmatpush.msra.mxu0 %v325
    %1049 = vmatpush.msra.mxu0 %v324
    %1050 = vmatmul.f32.gmra.mxu0 %v1032
    %v1051 = vpop.f32.mrf.mxu0
    %v1052 = vadd.f32 0.0, %v1051
    %1053 = vdwg.mxu0
    %v1054 = vadd.f32 %v1030, %v1052
    %v1055 = vmax.f32 %v1054, 0.0
    %v1056 = vld [vmem:[#allocation2 + $0xe0] sm:$0xff]
    %v1058 = vsel %vm61, %v1055, 0
    %1060 = vmatpush.msra.mxu0 0.0
    %1061 = vmatpush.msra.mxu0 0.0
    %1062 = vmatpush.msra.mxu0 0.0
    %1063 = vmatpush.msra.mxu0 0.0
    %1064 = vmatpush.msra.mxu0 0.0
    %1065 = vmatpush.msra.mxu0 0.0
    %1066 = vmatpush.msra.mxu0 0.0
    %1067 = vmatpush.msra.mxu0 0.0
    %1068 = vmatpush.msra.mxu0 0.0
    %1069 = vmatpush.msra.mxu0 0.0
    %1070 = vmatpush.msra.mxu0 0.0
    %1071 = vmatpush.msra.mxu0 0.0
    %1072 = vmatpush.msra.mxu0 %v327
    %1073 = vmatpush.msra.mxu0 %v326
    %1074 = vmatpush.msra.mxu0 %v325
    %1075 = vmatpush.msra.mxu0 %v324
    %1076 = vmatmul.f32.gmra.mxu0 %v1058
    %v1077 = vpop.f32.mrf.mxu0
    %v1078 = vadd.f32 0.0, %v1077
    %1079 = vdwg.mxu0
    %v1080 = vadd.f32 %v1056, %v1078
    %v1081 = vmax.f32 %v1080, 0.0
    %v1082 = vld [vmem:[#allocation2 + $0xe8] sm:$0xff]
    %v1084 = vsel %vm61, %v1081, 0
    %1086 = vmatpush.msra.mxu0 0.0
    %1087 = vmatpush.msra.mxu0 0.0
    %1088 = vmatpush.msra.mxu0 0.0
    %1089 = vmatpush.msra.mxu0 0.0
    %1090 = vmatpush.msra.mxu0 0.0
    %1091 = vmatpush.msra.mxu0 0.0
    %1092 = vmatpush.msra.mxu0 0.0
    %1093 = vmatpush.msra.mxu0 0.0
    %1094 = vmatpush.msra.mxu0 0.0
    %1095 = vmatpush.msra.mxu0 0.0
    %1096 = vmatpush.msra.mxu0 0.0
    %1097 = vmatpush.msra.mxu0 0.0
    %1098 = vmatpush.msra.mxu0 %v327
    %1099 = vmatpush.msra.mxu0 %v326
    %1100 = vmatpush.msra.mxu0 %v325
    %1101 = vmatpush.msra.mxu0 %v324
    %1102 = vmatmul.f32.gmra.mxu0 %v1084
    %v1103 = vpop.f32.mrf.mxu0
    %v1104 = vadd.f32 0.0, %v1103
    %1105 = vdwg.mxu0
    %v1106 = vadd.f32 %v1082, %v1104
    %v1107 = vmax.f32 %v1106, 0.0
    %v1108 = vld [vmem:[#allocation2 + $0xf0] sm:$0xff]
    %v1110 = vsel %vm61, %v1107, 0
    %1112 = vmatpush.msra.mxu0 0.0
    %1113 = vmatpush.msra.mxu0 0.0
    %1114 = vmatpush.msra.mxu0 0.0
    %1115 = vmatpush.msra.mxu0 0.0
    %1116 = vmatpush.msra.mxu0 0.0
    %1117 = vmatpush.msra.mxu0 0.0
    %1118 = vmatpush.msra.mxu0 0.0
    %1119 = vmatpush.msra.mxu0 0.0
    %1120 = vmatpush.msra.mxu0 0.0
    %1121 = vmatpush.msra.mxu0 0.0
    %1122 = vmatpush.msra.mxu0 0.0
    %1123 = vmatpush.msra.mxu0 0.0
    %1124 = vmatpush.msra.mxu0 %v327
    %1125 = vmatpush.msra.mxu0 %v326
    %1126 = vmatpush.msra.mxu0 %v325
    %1127 = vmatpush.msra.mxu0 %v324
    %1128 = vmatmul.f32.gmra.mxu0 %v1110
    %v1129 = vpop.f32.mrf.mxu0
    %v1130 = vadd.f32 0.0, %v1129
    %1131 = vdwg.mxu0
    %v1132 = vadd.f32 %v1108, %v1130
    %v1133 = vmax.f32 %v1132, 0.0
    %v1134 = vld [vmem:[#allocation2 + $0xf8] sm:$0xff]
    %v1136 = vsel %vm61, %v1133, 0
    %1138 = vmatpush.msra.mxu0 0.0
    %1139 = vmatpush.msra.mxu0 0.0
    %1140 = vmatpush.msra.mxu0 0.0
    %1141 = vmatpush.msra.mxu0 0.0
    %1142 = vmatpush.msra.mxu0 0.0
    %1143 = vmatpush.msra.mxu0 0.0
    %1144 = vmatpush.msra.mxu0 0.0
    %1145 = vmatpush.msra.mxu0 0.0
    %1146 = vmatpush.msra.mxu0 0.0
    %1147 = vmatpush.msra.mxu0 0.0
    %1148 = vmatpush.msra.mxu0 0.0
    %1149 = vmatpush.msra.mxu0 0.0
    %1150 = vmatpush.msra.mxu0 %v327
    %1151 = vmatpush.msra.mxu0 %v326
    %1152 = vmatpush.msra.mxu0 %v325
    %1153 = vmatpush.msra.mxu0 %v324
    %1154 = vmatmul.f32.gmra.mxu0 %v1136
    %v1155 = vpop.f32.mrf.mxu0
    %v1156 = vadd.f32 0.0, %v1155
    %1157 = vdwg.mxu0
    %v1158 = vadd.f32 %v1134, %v1156
    %v1159 = vmax.f32 %v1158, 0.0
    %v1160 = vld [vmem:[#allocation2 + $0x100] sm:$0xff]
    %v1162 = vsel %vm61, %v1159, 0
    %1164 = vmatpush.msra.mxu0 0.0
    %1165 = vmatpush.msra.mxu0 0.0
    %1166 = vmatpush.msra.mxu0 0.0
    %1167 = vmatpush.msra.mxu0 0.0
    %1168 = vmatpush.msra.mxu0 0.0
    %1169 = vmatpush.msra.mxu0 0.0
    %1170 = vmatpush.msra.mxu0 0.0
    %1171 = vmatpush.msra.mxu0 0.0
    %1172 = vmatpush.msra.mxu0 0.0
    %1173 = vmatpush.msra.mxu0 0.0
    %1174 = vmatpush.msra.mxu0 0.0
    %1175 = vmatpush.msra.mxu0 0.0
    %1176 = vmatpush.msra.mxu0 %v327
    %1177 = vmatpush.msra.mxu0 %v326
    %1178 = vmatpush.msra.mxu0 %v325
    %1179 = vmatpush.msra.mxu0 %v324
    %1180 = vmatmul.f32.gmra.mxu0 %v1162
    %v1181 = vpop.f32.mrf.mxu0
    %v1182 = vadd.f32 0.0, %v1181
    %1183 = vdwg.mxu0
    %v1184 = vadd.f32 %v1160, %v1182
    %v1185 = vmax.f32 %v1184, 0.0
    %v1186 = vld [vmem:[#allocation2 + $0x108] sm:$0xff]
    %v1188 = vsel %vm61, %v1185, 0
    %1190 = vmatpush.msra.mxu0 0.0
    %1191 = vmatpush.msra.mxu0 0.0
    %1192 = vmatpush.msra.mxu0 0.0
    %1193 = vmatpush.msra.mxu0 0.0
    %1194 = vmatpush.msra.mxu0 0.0
    %1195 = vmatpush.msra.mxu0 0.0
    %1196 = vmatpush.msra.mxu0 0.0
    %1197 = vmatpush.msra.mxu0 0.0
    %1198 = vmatpush.msra.mxu0 0.0
    %1199 = vmatpush.msra.mxu0 0.0
    %1200 = vmatpush.msra.mxu0 0.0
    %1201 = vmatpush.msra.mxu0 0.0
    %1202 = vmatpush.msra.mxu0 %v327
    %1203 = vmatpush.msra.mxu0 %v326
    %1204 = vmatpush.msra.mxu0 %v325
    %1205 = vmatpush.msra.mxu0 %v324
    %1206 = vmatmul.f32.gmra.mxu0 %v1188
    %v1207 = vpop.f32.mrf.mxu0
    %v1208 = vadd.f32 0.0, %v1207
    %1209 = vdwg.mxu0
    %v1210 = vadd.f32 %v1186, %v1208
    %v1211 = vmax.f32 %v1210, 0.0
    %v1212 = vld [vmem:[#allocation2 + $0x110] sm:$0xff]
    %v1214 = vsel %vm61, %v1211, 0
    %1216 = vmatpush.msra.mxu0 0.0
    %1217 = vmatpush.msra.mxu0 0.0
    %1218 = vmatpush.msra.mxu0 0.0
    %1219 = vmatpush.msra.mxu0 0.0
    %1220 = vmatpush.msra.mxu0 0.0
    %1221 = vmatpush.msra.mxu0 0.0
    %1222 = vmatpush.msra.mxu0 0.0
    %1223 = vmatpush.msra.mxu0 0.0
    %1224 = vmatpush.msra.mxu0 0.0
    %1225 = vmatpush.msra.mxu0 0.0
    %1226 = vmatpush.msra.mxu0 0.0
    %1227 = vmatpush.msra.mxu0 0.0
    %1228 = vmatpush.msra.mxu0 %v327
    %1229 = vmatpush.msra.mxu0 %v326
    %1230 = vmatpush.msra.mxu0 %v325
    %1231 = vmatpush.msra.mxu0 %v324
    %1232 = vmatmul.f32.gmra.mxu0 %v1214
    %v1233 = vpop.f32.mrf.mxu0
    %v1234 = vadd.f32 0.0, %v1233
    %1235 = vdwg.mxu0
    %v1236 = vadd.f32 %v1212, %v1234
    %v1237 = vmax.f32 %v1236, 0.0
    %1238 = vst.msk [vmem:[#allocation3] sm:$0xff] %vm61, %v1237
    // Predicated region
    $region18: #{tpu_custom_call.1} parent=1 // pred_check
      _
    $region19: #{tpu_custom_call.1} parent=1 // pred_check_branch
      %1240 = sbr.rel (0) target = $region21
    $region20: #{tpu_custom_call.1} parent=1 // pred_region
      %1242 = vsyncadd [#allocation4], 0
      %s1244 = sshll.u32 [#allocation3], 4
      %s1245 = int_to_ptr.vmem [resolvable:$true] %s1244
      %s1246 = sshll.u32 %s4, 4
      %s1247 = int_to_ptr.hbm [resolvable:$true] %s1246
      %1249 = dma.vmem_to_hbm [thread:$0]  %s1245, 128, %s1247, [#allocation4]
    $region21: #{tpu_custom_call.1} parent=1 // pred_fallthru
      _
    // Predicated region
    $region22: #{tpu_custom_call.1} parent=1 // pred_check
      _
    $region23: #{tpu_custom_call.1} parent=1 // pred_check_branch
      %1251 = sbr.rel (0) target = $region25
    $region24: #{tpu_custom_call.1} parent=1 // pred_region
      %1253 = dma.done [#allocation4], 128
    $region25: #{tpu_custom_call.1} parent=1 // pred_fallthru
      _
    %1254 = vsyncpa [#allocation4], 1

</llo_original>
